<compile_context>
chip_gen: v7x
topology: tpu7x:2x2x1
jax: 0.10.0
libtpu: 0.0.40
codegen_flags: <defaults>
</compile_context>

<pallas_src>
import functools

import numpy as np
import jax
import jax.numpy as jnp
from jax.experimental import pallas as pl
from jax.experimental.pallas import tpu as pltpu


def tabmlp3_kernel(x_ref,
                   w1_ref, b1_ref,
                   w2_ref, b2_ref,
                   w3_ref, b3_ref,
                   wo_ref, bo_ref,
                   o_ref, *, matmul_dtype):
    """One batch tile: 3 x (Linear -> ReLU) -> row-dot output layer.

    Eval-mode BatchNorm has already been folded into the *next* layer's
    weights/bias in the wrapper, so each layer is just relu(matmul + bias).
    """

    def mm(a, w_ref):
        # bf16 (or f32) MXU inputs with f32 accumulation.
        return jnp.dot(a.astype(matmul_dtype), w_ref[...],
                       preferred_element_type=jnp.float32)

    h = jnp.maximum(mm(x_ref[...], w1_ref) + b1_ref[...], 0.0)   # (tb, H) f32
    h = jnp.maximum(mm(h, w2_ref) + b2_ref[...], 0.0)            # BN1 folded
    h = jnp.maximum(mm(h, w3_ref) + b3_ref[...], 0.0)            # BN2 folded

    # Output layer (H -> 1): VPU multiply + XLU lane-reduce instead of an MXU
    # matmul with N=1 padded to a full MXU tile.  BN3 folded into wo/bo.
    y = jnp.sum(h * wo_ref[...], axis=-1, keepdims=True) + bo_ref[...]
    o_ref[...] = y.astype(o_ref.dtype)


def _fold_bn(gamma, beta, mean, var, eps):
    """Eval-mode BatchNorm1d -> per-feature scale/shift (f32)."""
    scale = gamma.astype(jnp.float32) / jnp.sqrt(var.astype(jnp.float32) + eps)
    shift = beta.astype(jnp.float32) - mean.astype(jnp.float32) * scale
    return scale, shift


def _fold_bn_into_next(w_next, b_next, gamma, beta, mean, var, eps):
    """next_linear(bn(h)) == h @ (s[:,None]*W) + (t @ W + b).  Exact in f32."""
    s, t = _fold_bn(gamma, beta, mean, var, eps)
    w_next = w_next.astype(jnp.float32)
    b_next = b_next.astype(jnp.float32)
    return s[:, None] * w_next, b_next + t @ w_next


def _round_up(n, m):
    return ((n + m - 1) // m) * m


def _choose_tb(B, d_in, H, matmul_itemsize, act_budget_bytes):
    """Largest sensible batch tile that keeps live activations inside VMEM."""
    # Live VMEM per batch row inside the body: ~3 concurrent (tb, H) f32
    # intermediates + one (tb, H) matmul-dtype cast temp + double-buffered
    # x tile and (tb, 1) output tile.
    per_row = 3 * H * 4 + H * matmul_itemsize + 2 * d_in * 4 + 2 * 4
    cap = max(act_budget_bytes // per_row, 8)
    if B < 128:
        # Tiny batch: one small tile (MXU M under-filled, but B is tiny anyway).
        return min(_round_up(B, 8), max((cap // 8) * 8, 8))
    for cand in (256, 128):      # fills the MXU M dim (v6e/v7x: 256, v5e: 128)
        if cap >= cand:
            return cand
    return max((cap // 8) * 8, 8)


def tabmlp3_forward(x, params, *, tb=None, matmul_dtype=jnp.bfloat16,
                    eps=1e-5):
    """x: [B, d_in] f32.  params: transposed weights ([fan_in, fan_out]),
    biases, and eval-mode BatchNorm running stats."""
    B, d_in = x.shape
    H = params["w1"].shape[1]
    itemsize = np.dtype(matmul_dtype).itemsize

    # --- Fold eval-mode BN into the following Linear layer (f32, exact). ----
    w1 = params["w1"].astype(jnp.float32)
    b1 = params["b1"].astype(jnp.float32)
    w2, b2 = _fold_bn_into_next(params["w2"], params["b2"],
                                params["g1"], params["beta1"],
                                params["m1"], params["v1"], eps)
    w3, b3 = _fold_bn_into_next(params["w3"], params["b3"],
                                params["g2"], params["beta2"],
                                params["m2"], params["v2"], eps)
    wo, bo = _fold_bn_into_next(params["wo"], params["bo"],
                                params["g3"], params["beta3"],
                                params["m3"], params["v3"], eps)

    # MXU operands in matmul dtype (cast AFTER the f32 fold); biases and the
    # output row stay f32 (VPU side).
    w1 = w1.astype(matmul_dtype)                 # (d_in, H)
    w2 = w2.astype(matmul_dtype)                 # (H, H)   BN1 folded in
    w3 = w3.astype(matmul_dtype)                 # (H, H)   BN2 folded in
    b1 = b1.reshape(1, H)
    b2 = b2.reshape(1, H)
    b3 = b3.reshape(1, H)
    wo = wo.reshape(1, H).astype(jnp.float32)    # BN3 folded in, used on VPU
    bo = bo.reshape(1, 1)

    # --- Pick the batch tile from a VMEM budget (v7x has only 64 MiB). ------
    weight_bytes = (d_in * H + 2 * H * H) * itemsize + (3 * H + H + 1) * 4
    vmem_target = 48 * 1024 * 1024        # headroom below v7x's 64 MiB physical
    act_budget = max(vmem_target - 2 * weight_bytes, 4 * 1024 * 1024)
    if tb is None:
        tb = _choose_tb(B, d_in, H, itemsize, act_budget)
    assert tb % 8 == 0, tb

    # Pad the batch to a multiple of tb; padded rows are sliced off below.
    B_pad = _round_up(B, tb)
    if B_pad != B:
        x = jnp.pad(x, ((0, B_pad - B), (0, 0)))
    x = x.astype(jnp.float32)
    grid_steps = B_pad // tb

    # At small per-call batches this kernel is weight-HBM-bound: splitting the
    # grid across both v7x TensorCores ("parallel") duplicates the one-time
    # weight fetch for no net win.  Only go parallel once there is enough
    # per-core compute to amortize the duplicated fetch.
    # TODO(synk): for persistently small batches, amortize the weight fetch
    # across calls (cross-call prefetch / caller-side batching).
    parallel = grid_steps >= 2 and B_pad >= 4096
    dim_semantics = ("parallel",) if parallel else ("arbitrary",)

    operands = (x, w1, b1, w2, b2, w3, b3, wo, bo)
    flops = 2 * B_pad * (d_in * H + 2 * H * H + H)
    bytes_accessed = int(sum(int(a.size) * a.dtype.itemsize for a in operands)
                         + B_pad * 4)            # + output [B_pad, 1] f32

    kernel = functools.partial(tabmlp3_kernel, matmul_dtype=matmul_dtype)

    def _call(single_buffer_params):
        buffers = 1 if single_buffer_params else 2
        act_bytes = (tb * (3 * H * 4 + H * itemsize)
                     + 2 * tb * d_in * 4 + 2 * tb * 4)
        vmem_limit = int((buffers * weight_bytes + act_bytes) * 1.25) + (4 << 20)
        vmem_limit = min(max(vmem_limit, 16 * 1024 * 1024), 64 * 1024 * 1024)

        def param_spec(shape):
            # Parameters use constant index_maps (fetched once); single-buffer
            # them so the two HxH weights don't pay 2x VMEM at larger H.
            idx = lambda i: (0,) * len(shape)
            if single_buffer_params:
                return pl.BlockSpec(shape, idx, pipeline_mode=pl.Buffered(1))
            return pl.BlockSpec(shape, idx)

        return pl.pallas_call(
            kernel,
            out_shape=jax.ShapeDtypeStruct((B_pad, 1), jnp.float32),
            grid_spec=pltpu.PrefetchScalarGridSpec(
                num_scalar_prefetch=0,
                grid=(grid_steps,),
                in_specs=[
                    pl.BlockSpec((tb, d_in), lambda i: (i, 0)),  # x (streamed)
                    param_spec((d_in, H)),   # w1
                    param_spec((1, H)),      # b1
                    param_spec((H, H)),      # w2  (BN1 folded in)
                    param_spec((1, H)),      # b2  (BN1 folded in)
                    param_spec((H, H)),      # w3  (BN2 folded in)
                    param_spec((1, H)),      # b3  (BN2 folded in)
                    param_spec((1, H)),      # w_out row (BN3 folded in, f32)
                    param_spec((1, 1)),      # b_out     (BN3 folded in)
                ],
                out_specs=pl.BlockSpec((tb, 1), lambda i: (i, 0)),
            ),
            compiler_params=pltpu.CompilerParams(
                dimension_semantics=dim_semantics,
                vmem_limit_bytes=vmem_limit),
            cost_estimate=pl.CostEstimate(
                flops=flops, transcendentals=0,
                bytes_accessed=bytes_accessed),
        )(*operands)

    if hasattr(pl, "Buffered"):
        try:
            out = _call(single_buffer_params=True)
        except (TypeError, NotImplementedError, pltpu.LoweringException):
            # pipeline_mode=pl.Buffered(1) unsupported by this jax build: fall
            # back to default double-buffered weights (2x VMEM, still correct).
            out = _call(single_buffer_params=False)
    else:
        out = _call(single_buffer_params=False)

    return out[:B]


if __name__ == "__main__":
    # Module default input_shape=12; H is a constructor argument — use a small
    # H (multiple of 128) so the demo runs quickly, and a batch that fills one
    # 256-row MXU tile (single grid step, no duplicated weight DMA).
    B, D_IN, H = 256, 12, 256
    eps = 1e-5

    keys = iter(jax.random.split(jax.random.PRNGKey(0), 24))

    x = jax.random.normal(next(keys), (B, D_IN), jnp.float32)

    def linear_init(fan_in, fan_out):
        lim = 1.0 / np.sqrt(fan_in)
        w = jax.random.uniform(next(keys), (fan_in, fan_out), jnp.float32, -lim, lim)
        b = jax.random.uniform(next(keys), (fan_out,), jnp.float32, -lim, lim)
        return w, b          # w is Linear.weight.T  ([fan_in, fan_out])

    def bn_init(n):
        gamma = jax.random.uniform(next(keys), (n,), jnp.float32, 0.5, 1.5)
        beta = 0.1 * jax.random.normal(next(keys), (n,), jnp.float32)
        mean = 0.1 * jax.random.normal(next(keys), (n,), jnp.float32)
        var = jax.random.uniform(next(keys), (n,), jnp.float32, 0.5, 1.5)
        return gamma, beta, mean, var

    w1, b1 = linear_init(D_IN, H)
    w2, b2 = linear_init(H, H)
    w3, b3 = linear_init(H, H)
    wo, bo = linear_init(H, 1)
    g1, be1, m1, v1 = bn_init(H)
    g2, be2, m2, v2 = bn_init(H)
    g3, be3, m3, v3 = bn_init(H)

    params = dict(w1=w1, b1=b1, g1=g1, beta1=be1, m1=m1, v1=v1,
                  w2=w2, b2=b2, g2=g2, beta2=be2, m2=m2, v2=v2,
                  w3=w3, b3=b3, g3=g3, beta3=be3, m3=m3, v3=v3,
                  wo=wo, bo=bo)

    out = tabmlp3_forward(x, params)
    out = jax.block_until_ready(out)
    assert out.shape == (B, 1), out.shape

    # Pure-JAX reference in the ORIGINAL (un-folded) formulation: eval-mode
    # BatchNorm with running stats.  Hidden-layer matmuls use bf16 inputs with
    # f32 accumulation to match the kernel's MXU precision; the output layer
    # is f32 like the kernel's VPU row-dot.
    def mm_bf16(a, w):
        return jnp.dot(a.astype(jnp.bfloat16), w.astype(jnp.bfloat16),
                       preferred_element_type=jnp.float32)

    def bn(h, g, bta, m, v):
        s = g / jnp.sqrt(v + eps)
        return h * s + (bta - m * s)

    h = bn(jnp.maximum(mm_bf16(x, w1) + b1, 0.0), g1, be1, m1, v1)
    h = bn(jnp.maximum(mm_bf16(h, w2) + b2, 0.0), g2, be2, m2, v2)
    h = bn(jnp.maximum(mm_bf16(h, w3) + b3, 0.0), g3, be3, m3, v3)
    ref = jnp.dot(h, wo, preferred_element_type=jnp.float32) + bo

    np.testing.assert_allclose(np.asarray(out), np.asarray(ref),
                               rtol=2e-2, atol=2e-2)
    print("KERNEL_OK")
</pallas_src>

<mosaic_0001>
module attributes {stable_mosaic.version = 11 : i64} {
  func.func @tabmlp3_kernel(%arg0: i32, %arg1: memref<256x12xf32, #tpu.memory_space<vmem>>, %arg2: memref<12x256xbf16, #tpu.memory_space<vmem>>, %arg3: memref<1x256xf32, #tpu.memory_space<vmem>>, %arg4: memref<256x256xbf16, #tpu.memory_space<vmem>>, %arg5: memref<1x256xf32, #tpu.memory_space<vmem>>, %arg6: memref<256x256xbf16, #tpu.memory_space<vmem>>, %arg7: memref<1x256xf32, #tpu.memory_space<vmem>>, %arg8: memref<1x256xf32, #tpu.memory_space<vmem>>, %arg9: memref<1x1xf32, #tpu.memory_space<vmem>>, %arg10: memref<256x1xf32, #tpu.memory_space<vmem>>) attributes {dimension_semantics = [#tpu.dimension_semantics<arbitrary>], iteration_bounds = array<i64: 1>, scalar_prefetch = 0 : i64, scratch_operands = 0 : i64, tpu.core_type = #tpu.core_type<tc>, window_params = [{transform_indices = @transform_0, window_bounds = array<i64: 256, 12>}, {pipeline_mode = #tpu.pipeline_mode<synchronous>, transform_indices = @transform_1, window_bounds = array<i64: 12, 256>}, {pipeline_mode = #tpu.pipeline_mode<synchronous>, transform_indices = @transform_2, window_bounds = array<i64: 1, 256>}, {pipeline_mode = #tpu.pipeline_mode<synchronous>, transform_indices = @transform_3, window_bounds = array<i64: 256, 256>}, {pipeline_mode = #tpu.pipeline_mode<synchronous>, transform_indices = @transform_4, window_bounds = array<i64: 1, 256>}, {pipeline_mode = #tpu.pipeline_mode<synchronous>, transform_indices = @transform_5, window_bounds = array<i64: 256, 256>}, {pipeline_mode = #tpu.pipeline_mode<synchronous>, transform_indices = @transform_6, window_bounds = array<i64: 1, 256>}, {pipeline_mode = #tpu.pipeline_mode<synchronous>, transform_indices = @transform_7, window_bounds = array<i64: 1, 256>}, {pipeline_mode = #tpu.pipeline_mode<synchronous>, transform_indices = @transform_8, window_bounds = array<i64: 1, 1>}, {transform_indices = @transform_9, window_bounds = array<i64: 256, 1>}]} {
    %c0 = arith.constant 0 : index
    %c0_0 = arith.constant 0 : index
    %0 = vector.load %arg1[%c0, %c0_0] : memref<256x12xf32, #tpu.memory_space<vmem>>, vector<256x12xf32>
    %1 = arith.truncf %0 : vector<256x12xf32> to vector<256x12xbf16>
    %c0_1 = arith.constant 0 : index
    %c0_2 = arith.constant 0 : index
    %2 = vector.load %arg2[%c0_1, %c0_2] : memref<12x256xbf16, #tpu.memory_space<vmem>>, vector<12x256xbf16>
    %cst = arith.constant dense<0.000000e+00> : vector<256x256xf32>
    %3 = tpu.matmul %1, %2, %cst {dimension_numbers = #tpu.dot_dimension_numbers<[1], [0], [0], [1], [0, 0, 1, 1], [], []>} : vector<256x12xbf16>, vector<12x256xbf16>, vector<256x256xf32> -> vector<256x256xf32>
    %c0_3 = arith.constant 0 : index
    %c0_4 = arith.constant 0 : index
    %4 = vector.load %arg3[%c0_3, %c0_4] : memref<1x256xf32, #tpu.memory_space<vmem>>, vector<1x256xf32>
    %5 = vector.broadcast %4 : vector<1x256xf32> to vector<256x256xf32>
    %6 = arith.addf %3, %5 : vector<256x256xf32>
    %cst_5 = arith.constant 0.000000e+00 : f32
    %7 = vector.broadcast %cst_5 : f32 to vector<256x256xf32>
    %8 = arith.maximumf %6, %7 : vector<256x256xf32>
    %9 = arith.truncf %8 : vector<256x256xf32> to vector<256x256xbf16>
    %c0_6 = arith.constant 0 : index
    %c0_7 = arith.constant 0 : index
    %10 = vector.load %arg4[%c0_6, %c0_7] : memref<256x256xbf16, #tpu.memory_space<vmem>>, vector<256x256xbf16>
    %cst_8 = arith.constant dense<0.000000e+00> : vector<256x256xf32>
    %11 = tpu.matmul %9, %10, %cst_8 {dimension_numbers = #tpu.dot_dimension_numbers<[1], [0], [0], [1], [0, 0, 1, 1], [], []>} : vector<256x256xbf16>, vector<256x256xbf16>, vector<256x256xf32> -> vector<256x256xf32>
    %c0_9 = arith.constant 0 : index
    %c0_10 = arith.constant 0 : index
    %12 = vector.load %arg5[%c0_9, %c0_10] : memref<1x256xf32, #tpu.memory_space<vmem>>, vector<1x256xf32>
    %13 = vector.broadcast %12 : vector<1x256xf32> to vector<256x256xf32>
    %14 = arith.addf %11, %13 : vector<256x256xf32>
    %cst_11 = arith.constant 0.000000e+00 : f32
    %15 = vector.broadcast %cst_11 : f32 to vector<256x256xf32>
    %16 = arith.maximumf %14, %15 : vector<256x256xf32>
    %17 = arith.truncf %16 : vector<256x256xf32> to vector<256x256xbf16>
    %c0_12 = arith.constant 0 : index
    %c0_13 = arith.constant 0 : index
    %18 = vector.load %arg6[%c0_12, %c0_13] : memref<256x256xbf16, #tpu.memory_space<vmem>>, vector<256x256xbf16>
    %cst_14 = arith.constant dense<0.000000e+00> : vector<256x256xf32>
    %19 = tpu.matmul %17, %18, %cst_14 {dimension_numbers = #tpu.dot_dimension_numbers<[1], [0], [0], [1], [0, 0, 1, 1], [], []>} : vector<256x256xbf16>, vector<256x256xbf16>, vector<256x256xf32> -> vector<256x256xf32>
    %c0_15 = arith.constant 0 : index
    %c0_16 = arith.constant 0 : index
    %20 = vector.load %arg7[%c0_15, %c0_16] : memref<1x256xf32, #tpu.memory_space<vmem>>, vector<1x256xf32>
    %21 = vector.broadcast %20 : vector<1x256xf32> to vector<256x256xf32>
    %22 = arith.addf %19, %21 : vector<256x256xf32>
    %cst_17 = arith.constant 0.000000e+00 : f32
    %23 = vector.broadcast %cst_17 : f32 to vector<256x256xf32>
    %24 = arith.maximumf %22, %23 : vector<256x256xf32>
    %c0_18 = arith.constant 0 : index
    %c0_19 = arith.constant 0 : index
    %25 = vector.load %arg8[%c0_18, %c0_19] : memref<1x256xf32, #tpu.memory_space<vmem>>, vector<1x256xf32>
    %26 = vector.broadcast %25 : vector<1x256xf32> to vector<256x256xf32>
    %27 = arith.mulf %24, %26 : vector<256x256xf32>
    %cst_20 = arith.constant dense<0.000000e+00> : vector<256xf32>
    %28 = vector.multi_reduction <add>, %27, %cst_20 [1] : vector<256x256xf32> to vector<256xf32>
    %29 = vector.shape_cast %28 : vector<256xf32> to vector<256x1xf32>
    %c0_21 = arith.constant 0 : index
    %c0_22 = arith.constant 0 : index
    %30 = vector.load %arg9[%c0_21, %c0_22] : memref<1x1xf32, #tpu.memory_space<vmem>>, vector<1x1xf32>
    %31 = vector.broadcast %30 : vector<1x1xf32> to vector<256x1xf32>
    %32 = arith.addf %29, %31 : vector<256x1xf32>
    %c0_23 = arith.constant 0 : index
    %c0_24 = arith.constant 0 : index
    %33 = vector.load %arg10[%c0_23, %c0_24] : memref<256x1xf32, #tpu.memory_space<vmem>>, vector<256x1xf32>
    tpu.vector_store %arg10[%c0_23, %c0_24], %32 {strides = array<i32>} : memref<256x1xf32, #tpu.memory_space<vmem>>, vector<256x1xf32>,
    return
  }
  func.func @transform_0(%arg0: i32) -> (i32, i32) {
    %c0_i32 = arith.constant 0 : i32
    %c0_i32_0 = arith.constant 0 : i32
    return %arg0, %c0_i32 : i32, i32
  }
  func.func @transform_1(%arg0: i32) -> (i32, i32) {
    %c0_i32 = arith.constant 0 : i32
    %c0_i32_0 = arith.constant 0 : i32
    %c0_i32_1 = arith.constant 0 : i32
    return %c0_i32, %c0_i32_0 : i32, i32
  }
  func.func @transform_2(%arg0: i32) -> (i32, i32) {
    %c0_i32 = arith.constant 0 : i32
    %c0_i32_0 = arith.constant 0 : i32
    %c0_i32_1 = arith.constant 0 : i32
    return %c0_i32, %c0_i32_0 : i32, i32
  }
  func.func @transform_3(%arg0: i32) -> (i32, i32) {
    %c0_i32 = arith.constant 0 : i32
    %c0_i32_0 = arith.constant 0 : i32
    %c0_i32_1 = arith.constant 0 : i32
    return %c0_i32, %c0_i32_0 : i32, i32
  }
  func.func @transform_4(%arg0: i32) -> (i32, i32) {
    %c0_i32 = arith.constant 0 : i32
    %c0_i32_0 = arith.constant 0 : i32
    %c0_i32_1 = arith.constant 0 : i32
    return %c0_i32, %c0_i32_0 : i32, i32
  }
  func.func @transform_5(%arg0: i32) -> (i32, i32) {
    %c0_i32 = arith.constant 0 : i32
    %c0_i32_0 = arith.constant 0 : i32
    %c0_i32_1 = arith.constant 0 : i32
    return %c0_i32, %c0_i32_0 : i32, i32
  }
  func.func @transform_6(%arg0: i32) -> (i32, i32) {
    %c0_i32 = arith.constant 0 : i32
    %c0_i32_0 = arith.constant 0 : i32
    %c0_i32_1 = arith.constant 0 : i32
    return %c0_i32, %c0_i32_0 : i32, i32
  }
  func.func @transform_7(%arg0: i32) -> (i32, i32) {
    %c0_i32 = arith.constant 0 : i32
    %c0_i32_0 = arith.constant 0 : i32
    %c0_i32_1 = arith.constant 0 : i32
    return %c0_i32, %c0_i32_0 : i32, i32
  }
  func.func @transform_8(%arg0: i32) -> (i32, i32) {
    %c0_i32 = arith.constant 0 : i32
    %c0_i32_0 = arith.constant 0 : i32
    %c0_i32_1 = arith.constant 0 : i32
    return %c0_i32, %c0_i32_0 : i32, i32
  }
  func.func @transform_9(%arg0: i32) -> (i32, i32) {
    %c0_i32 = arith.constant 0 : i32
    %c0_i32_0 = arith.constant 0 : i32
    return %arg0, %c0_i32 : i32, i32
  }
}

</mosaic_0001>

<llo_original>
// kernel: tpu_custom_call.1
$region0: #{tpu_custom_call.1}
  #allocation0 [shape = 'u32[]', space=smem, size = 0x4, offset = 0x4, fixed_abs, tag = 'smem constant byte address 0x4 - core index']
  #allocation1 [shape = 'u32[144,128]{1,0:T(1,128)}', space=vmem, size = 0x12000, scoped, tag = 'internal scratch']
  #allocation2 [shape = 'f32[1,1]{1,0:T(1,128)S(1)}', space=vmem, size = 0x200, scoped, tag = 'scoped memory for tpu_custom_call.1']
  %s0 = inlined_call_operand.vmem [shape: f32[256,12], index: 0, kind: input, shape index: {}]
  %s1 = inlined_call_operand.vmem [shape: bf16[12,256], index: 1, kind: input, shape index: {}]
  %s2 = inlined_call_operand.vmem [shape: f32[1,256], index: 2, kind: input, shape index: {}]
  %s3 = inlined_call_operand.vmem [shape: bf16[256,256], index: 3, kind: input, shape index: {}]
  %s4 = inlined_call_operand.vmem [shape: f32[1,256], index: 4, kind: input, shape index: {}]
  %s5 = inlined_call_operand.hbm [shape: bf16[256,256], index: 5, kind: input, shape index: {}]
  %s6 = inlined_call_operand.vmem [shape: f32[1,256], index: 6, kind: input, shape index: {}]
  %s7 = inlined_call_operand.vmem [shape: f32[1,256], index: 7, kind: input, shape index: {}]
  %s8 = inlined_call_operand.<no memory space> [shape: f32[1,1], index: 8, kind: input, shape index: {}]
  %s9 = inlined_call_operand.vmem [shape: f32[256,1], index: 9, kind: output, shape index: {}]
  %s10 = sld [smem:[#allocation0]]
  $region50: #{tpu_custom_call.1} parent=0
    _
  %s12 = ssub.s32 1, %s10
  %s13 = scalar_select 0, %s12, %s10
  %v14 = vstv %s8
  %15 = vst [vmem:[#allocation2] sm:$0x1] %v14
  $region1: #{tpu_custom_call.1} parent=0
    #allocation3 [shape = 'u8[131072]{0}', space=vmem, size = 0x20000, scoped, tag = 'input window, operand 5, single buffered']
    #allocation4 [shape = 's32[1]{0}', space=sflag, size = 0x4, scoped, tag = 'scoped memory for tpu_custom_call.1']
    %16 = vsyncpa [#allocation4], 0
    // Predicated region
    $region2: #{tpu_custom_call.1} parent=1 // pred_check
      _
    $region3: #{tpu_custom_call.1} parent=1 // pred_check_branch
      %18 = sbr.rel (0) target = $region5
    $region4: #{tpu_custom_call.1} parent=1 // pred_region
      _
    $region5: #{tpu_custom_call.1} parent=1 // pred_fallthru
      _
    // Predicated region
    $region6: #{tpu_custom_call.1} parent=1 // pred_check
      _
    $region7: #{tpu_custom_call.1} parent=1 // pred_check_branch
      %20 = sbr.rel (0) target = $region9
    $region8: #{tpu_custom_call.1} parent=1 // pred_region
      _
    $region9: #{tpu_custom_call.1} parent=1 // pred_fallthru
      _
    // Predicated region
    $region10: #{tpu_custom_call.1} parent=1 // pred_check
      _
    $region11: #{tpu_custom_call.1} parent=1 // pred_check_branch
      %22 = sbr.rel (0) target = $region13
    $region12: #{tpu_custom_call.1} parent=1 // pred_region
      _
    $region13: #{tpu_custom_call.1} parent=1 // pred_fallthru
      _
    // Predicated region
    $region14: #{tpu_custom_call.1} parent=1 // pred_check
      _
    $region15: #{tpu_custom_call.1} parent=1 // pred_check_branch
      %24 = sbr.rel (0) target = $region17
    $region16: #{tpu_custom_call.1} parent=1 // pred_region
      _
    $region17: #{tpu_custom_call.1} parent=1 // pred_fallthru
      _
    // Predicated region
    $region18: #{tpu_custom_call.1} parent=1 // pred_check
      _
    $region19: #{tpu_custom_call.1} parent=1 // pred_check_branch
      %26 = sbr.rel (0) target = $region21
    $region20: #{tpu_custom_call.1} parent=1 // pred_region
      _
    $region21: #{tpu_custom_call.1} parent=1 // pred_fallthru
      _
    // Predicated region
    $region22: #{tpu_custom_call.1} parent=1 // pred_check
      _
    $region23: #{tpu_custom_call.1} parent=1 // pred_check_branch
      %28 = sbr.rel (0) target = $region25
    $region24: #{tpu_custom_call.1} parent=1 // pred_region
      %s30 = ssub.s32 4096, 4096
      %31 = vsyncadd [#allocation4], %s30
      %s32 = sshll.u32 [#allocation3], 4
      %s33 = int_to_ptr.vmem [resolvable:$true] %s32
      %38 = dma.hbm_to_vmem [thread:$0]  %s5, 4096, %s33, [#allocation4], 128, 128, 8
    $region25: #{tpu_custom_call.1} parent=1 // pred_fallthru
      _
    // Predicated region
    $region26: #{tpu_custom_call.1} parent=1 // pred_check
      _
    $region27: #{tpu_custom_call.1} parent=1 // pred_check_branch
      %40 = sbr.rel (0) target = $region29
    $region28: #{tpu_custom_call.1} parent=1 // pred_region
      _
    $region29: #{tpu_custom_call.1} parent=1 // pred_fallthru
      _
    // Predicated region
    $region30: #{tpu_custom_call.1} parent=1 // pred_check
      _
    $region31: #{tpu_custom_call.1} parent=1 // pred_check_branch
      %42 = sbr.rel (0) target = $region33
    $region32: #{tpu_custom_call.1} parent=1 // pred_region
      _
    $region33: #{tpu_custom_call.1} parent=1 // pred_fallthru
      _
    // Predicated region
    $region34: #{tpu_custom_call.1} parent=1 // pred_check
      _
    $region35: #{tpu_custom_call.1} parent=1 // pred_check_branch
      %44 = sbr.rel (0) target = $region37
    $region36: #{tpu_custom_call.1} parent=1 // pred_region
      _
    $region37: #{tpu_custom_call.1} parent=1 // pred_fallthru
      _
    // Predicated region
    $region38: #{tpu_custom_call.1} parent=1 // pred_check
      _
    $region39: #{tpu_custom_call.1} parent=1 // pred_check_branch
      %46 = sbr.rel (0) target = $region41
    $region40: #{tpu_custom_call.1} parent=1 // pred_region
      %47 = dma.done [#allocation4], 4096
    $region41: #{tpu_custom_call.1} parent=1 // pred_fallthru
      _
    %v49 = vld [vmem:[%s0] sm:$0xff]
    %v50 = vld [vmem:[%s0 + $0x8] sm:$0xff]
    %v51 = vld [vmem:[%s0 + $0x10] sm:$0xff]
    %v52 = vld [vmem:[%s0 + $0x18] sm:$0xff]
    %v53 = vld [vmem:[%s0 + $0x20] sm:$0xff]
    %v54 = vld [vmem:[%s0 + $0x28] sm:$0xff]
    %v55 = vld [vmem:[%s0 + $0x30] sm:$0xff]
    %v56 = vld [vmem:[%s0 + $0x38] sm:$0xff]
    %v57 = vld [vmem:[%s0 + $0x40] sm:$0xff]
    %v58 = vld [vmem:[%s0 + $0x48] sm:$0xff]
    %v59 = vld [vmem:[%s0 + $0x50] sm:$0xff]
    %v60 = vld [vmem:[%s0 + $0x58] sm:$0xff]
    %v61 = vld [vmem:[%s0 + $0x60] sm:$0xff]
    %v62 = vld [vmem:[%s0 + $0x68] sm:$0xff]
    %v63 = vld [vmem:[%s0 + $0x70] sm:$0xff]
    %v64 = vld [vmem:[%s0 + $0x78] sm:$0xff]
    %v65 = vld [vmem:[%s0 + $0x80] sm:$0xff]
    %v66 = vld [vmem:[%s0 + $0x88] sm:$0xff]
    %v67 = vld [vmem:[%s0 + $0x90] sm:$0xff]
    %v68 = vld [vmem:[%s0 + $0x98] sm:$0xff]
    %v69 = vld [vmem:[%s0 + $0xa0] sm:$0xff]
    %v70 = vld [vmem:[%s0 + $0xa8] sm:$0xff]
    %v71 = vld [vmem:[%s0 + $0xb0] sm:$0xff]
    %v72 = vld [vmem:[%s0 + $0xb8] sm:$0xff]
    %v73 = vld [vmem:[%s0 + $0xc0] sm:$0xff]
    %v74 = vld [vmem:[%s0 + $0xc8] sm:$0xff]
    %v75 = vld [vmem:[%s0 + $0xd0] sm:$0xff]
    %v76 = vld [vmem:[%s0 + $0xd8] sm:$0xff]
    %v77 = vld [vmem:[%s0 + $0xe0] sm:$0xff]
    %v78 = vld [vmem:[%s0 + $0xe8] sm:$0xff]
    %v79 = vld [vmem:[%s0 + $0xf0] sm:$0xff]
    %v80 = vld [vmem:[%s0 + $0xf8] sm:$0xff]
    %v81 = vpack.c.bf16 %v50, %v49
    %v82 = vpack.c.bf16 %v52, %v51
    %v83 = vpack.c.bf16 %v54, %v53
    %v84 = vpack.c.bf16 %v56, %v55
    %v85 = vpack.c.bf16 %v58, %v57
    %v86 = vpack.c.bf16 %v60, %v59
    %v87 = vpack.c.bf16 %v62, %v61
    %v88 = vpack.c.bf16 %v64, %v63
    %v89 = vpack.c.bf16 %v66, %v65
    %v90 = vpack.c.bf16 %v68, %v67
    %v91 = vpack.c.bf16 %v70, %v69
    %v92 = vpack.c.bf16 %v72, %v71
    %v93 = vpack.c.bf16 %v74, %v73
    %v94 = vpack.c.bf16 %v76, %v75
    %v95 = vpack.c.bf16 %v78, %v77
    %v96 = vpack.c.bf16 %v80, %v79
    %v97 = vld [vmem:[%s1] sm:$0xff]
    %v98 = vld [vmem:[%s1 + $0x8] sm:$0x33]
    %v99 = vld [vmem:[%s2] sm:$0x3]
    %v101 = vlaneseq
    %v102 = vshrl.u32 %v101, 7
    %v103 = vsub.s32 0, %v102
    %v104 = vrot.slane %v99, %v103
    %v105 = vlaneseq
    %v106 = vshrl.u32 %v105, 7
    %v107 = vsub.s32 1, %v106
    %v108 = vrot.slane %v99, %v107
    %v113 = vunpack.c.l.b16 %v97
    %v114 = vunpack.c.h.b16 %v97
    %v115 = vunpack.c.l.b16 %v98
    %v116 = vunpack.c.h.b16 %v98
    %v117 = vpack.c.b16 %v115, %v113
    %v118 = vpack.c.b16 %v116, %v114
    %vm119 = vcmask 97280
    %v121 = vsel %vm119, %v81, 0
    %v124 = vsel %vm119, %v82, 0
    %v127 = vsel %vm119, %v83, 0
    %v130 = vsel %vm119, %v84, 0
    %v133 = vsel %vm119, %v85, 0
    %v136 = vsel %vm119, %v86, 0
    %v139 = vsel %vm119, %v87, 0
    %v142 = vsel %vm119, %v88, 0
    %v145 = vsel %vm119, %v89, 0
    %v148 = vsel %vm119, %v90, 0
    %v151 = vsel %vm119, %v91, 0
    %v154 = vsel %vm119, %v92, 0
    %v157 = vsel %vm119, %v93, 0
    %v160 = vsel %vm119, %v94, 0
    %v163 = vsel %vm119, %v95, 0
    %v166 = vsel %vm119, %v96, 0
    %vm168 = vcmask 1045504
    %v170 = vsel %vm168, %v117, 0
    %v173 = vsel %vm168, %v118, 0
    %175 = vmatprep.subr.bf16.mxu0 %v173
    %176 = vmatpush1.bf16.msra.mxu0 %v170
    %177 = vmatprep.subr.bf16.mxu0 0
    %178 = vmatpush1.bf16.msra.mxu0 0
    %179 = vmatprep.subr.bf16.mxu0 0
    %180 = vmatpush1.bf16.msra.mxu0 0
    %181 = vmatprep.subr.bf16.mxu0 0
    %182 = vmatpush1.bf16.msra.mxu0 0
    %183 = vmatprep.subr.bf16.mxu0 0
    %184 = vmatpush1.bf16.msra.mxu0 0
    %185 = vmatprep.subr.bf16.mxu0 0
    %186 = vmatpush1.bf16.msra.mxu0 0
    %187 = vmatprep.subr.bf16.mxu0 0
    %188 = vmatpush1.bf16.msra.mxu0 0
    %189 = vmatprep.subr.bf16.mxu0 0
    %190 = vmatpush1.bf16.msra.mxu0 0
    %191 = vmatprep.subr.bf16.mxu0 0
    %192 = vmatpush1.bf16.msra.mxu0 0
    %193 = vmatprep.subr.bf16.mxu0 0
    %194 = vmatpush1.bf16.msra.mxu0 0
    %195 = vmatprep.subr.bf16.mxu0 0
    %196 = vmatpush1.bf16.msra.mxu0 0
    %197 = vmatprep.subr.bf16.mxu0 0
    %198 = vmatpush1.bf16.msra.mxu0 0
    %199 = vmatprep.subr.bf16.mxu0 0
    %200 = vmatpush1.bf16.msra.mxu0 0
    %201 = vmatprep.subr.bf16.mxu0 0
    %202 = vmatpush1.bf16.msra.mxu0 0
    %203 = vmatprep.subr.bf16.mxu0 0
    %204 = vmatpush1.bf16.msra.mxu0 0
    %205 = vmatprep.subr.bf16.mxu0 0
    %206 = vmatpush1.bf16.msra.mxu0 0
    %207 = vmatprep.mubr.bf16.mxu0 0
    %208 = vmatmul.mubr.bf16.gmra.mrb[0].mxu0 %v121
    %v209 = vpop.f32.mrb[0].mxu0
    %v210 = vadd.f32 %v104, %v209
    %v211 = vpop.f32.mrb[0].mxu0
    %v212 = vadd.f32 %v108, %v211
    %v213 = vpop.f32.mrb[0].mxu0
    %v214 = vadd.f32 %v104, %v213
    %v215 = vpop.f32.mrb[0].mxu0
    %v216 = vadd.f32 %v108, %v215
    %217 = vmatprep.mubr.bf16.mxu0 0
    %218 = vmatmul.mubr.bf16.gmra.mrb[0].mxu0 %v124
    %v219 = vpop.f32.mrb[0].mxu0
    %v220 = vadd.f32 %v104, %v219
    %v221 = vpop.f32.mrb[0].mxu0
    %v222 = vadd.f32 %v108, %v221
    %v223 = vpop.f32.mrb[0].mxu0
    %v224 = vadd.f32 %v104, %v223
    %v225 = vpop.f32.mrb[0].mxu0
    %v226 = vadd.f32 %v108, %v225
    %227 = vmatprep.mubr.bf16.mxu0 0
    %228 = vmatmul.mubr.bf16.gmra.mrb[0].mxu0 %v127
    %v229 = vpop.f32.mrb[0].mxu0
    %v230 = vadd.f32 %v104, %v229
    %v231 = vpop.f32.mrb[0].mxu0
    %v232 = vadd.f32 %v108, %v231
    %v233 = vpop.f32.mrb[0].mxu0
    %v234 = vadd.f32 %v104, %v233
    %v235 = vpop.f32.mrb[0].mxu0
    %v236 = vadd.f32 %v108, %v235
    %237 = vmatprep.mubr.bf16.mxu0 0
    %238 = vmatmul.mubr.bf16.gmra.mrb[0].mxu0 %v130
    %v239 = vpop.f32.mrb[0].mxu0
    %v240 = vadd.f32 %v104, %v239
    %v241 = vpop.f32.mrb[0].mxu0
    %v242 = vadd.f32 %v108, %v241
    %v243 = vpop.f32.mrb[0].mxu0
    %v244 = vadd.f32 %v104, %v243
    %v245 = vpop.f32.mrb[0].mxu0
    %v246 = vadd.f32 %v108, %v245
    %247 = vmatprep.mubr.bf16.mxu0 0
    %248 = vmatmul.mubr.bf16.gmra.mrb[0].mxu0 %v133
    %v249 = vpop.f32.mrb[0].mxu0
    %v250 = vadd.f32 %v104, %v249
    %v251 = vpop.f32.mrb[0].mxu0
    %v252 = vadd.f32 %v108, %v251
    %v253 = vpop.f32.mrb[0].mxu0
    %v254 = vadd.f32 %v104, %v253
    %v255 = vpop.f32.mrb[0].mxu0
    %v256 = vadd.f32 %v108, %v255
    %257 = vmatprep.mubr.bf16.mxu0 0
    %258 = vmatmul.mubr.bf16.gmra.mrb[0].mxu0 %v136
    %v259 = vpop.f32.mrb[0].mxu0
    %v260 = vadd.f32 %v104, %v259
    %v261 = vpop.f32.mrb[0].mxu0
    %v262 = vadd.f32 %v108, %v261
    %v263 = vpop.f32.mrb[0].mxu0
    %v264 = vadd.f32 %v104, %v263
    %v265 = vpop.f32.mrb[0].mxu0
    %v266 = vadd.f32 %v108, %v265
    %267 = vmatprep.mubr.bf16.mxu0 0
    %268 = vmatmul.mubr.bf16.gmra.mrb[0].mxu0 %v139
    %v269 = vpop.f32.mrb[0].mxu0
    %v270 = vadd.f32 %v104, %v269
    %v271 = vpop.f32.mrb[0].mxu0
    %v272 = vadd.f32 %v108, %v271
    %v273 = vpop.f32.mrb[0].mxu0
    %v274 = vadd.f32 %v104, %v273
    %v275 = vpop.f32.mrb[0].mxu0
    %v276 = vadd.f32 %v108, %v275
    %277 = vmatprep.mubr.bf16.mxu0 0
    %278 = vmatmul.mubr.bf16.gmra.mrb[0].mxu0 %v142
    %v279 = vpop.f32.mrb[0].mxu0
    %v280 = vadd.f32 %v104, %v279
    %v281 = vpop.f32.mrb[0].mxu0
    %v282 = vadd.f32 %v108, %v281
    %v283 = vpop.f32.mrb[0].mxu0
    %v284 = vadd.f32 %v104, %v283
    %v285 = vpop.f32.mrb[0].mxu0
    %v286 = vadd.f32 %v108, %v285
    %287 = vmatprep.mubr.bf16.mxu0 0
    %288 = vmatmul.mubr.bf16.gmra.mrb[0].mxu0 %v145
    %v289 = vpop.f32.mrb[0].mxu0
    %v290 = vadd.f32 %v104, %v289
    %v291 = vpop.f32.mrb[0].mxu0
    %v292 = vadd.f32 %v108, %v291
    %v293 = vpop.f32.mrb[0].mxu0
    %v294 = vadd.f32 %v104, %v293
    %v295 = vpop.f32.mrb[0].mxu0
    %v296 = vadd.f32 %v108, %v295
    %297 = vmatprep.mubr.bf16.mxu0 0
    %298 = vmatmul.mubr.bf16.gmra.mrb[0].mxu0 %v148
    %v299 = vpop.f32.mrb[0].mxu0
    %v300 = vadd.f32 %v104, %v299
    %v301 = vpop.f32.mrb[0].mxu0
    %v302 = vadd.f32 %v108, %v301
    %v303 = vpop.f32.mrb[0].mxu0
    %v304 = vadd.f32 %v104, %v303
    %v305 = vpop.f32.mrb[0].mxu0
    %v306 = vadd.f32 %v108, %v305
    %307 = vmatprep.mubr.bf16.mxu0 0
    %308 = vmatmul.mubr.bf16.gmra.mrb[0].mxu0 %v151
    %v309 = vpop.f32.mrb[0].mxu0
    %v310 = vadd.f32 %v104, %v309
    %v311 = vpop.f32.mrb[0].mxu0
    %v312 = vadd.f32 %v108, %v311
    %v313 = vpop.f32.mrb[0].mxu0
    %v314 = vadd.f32 %v104, %v313
    %v315 = vpop.f32.mrb[0].mxu0
    %v316 = vadd.f32 %v108, %v315
    %317 = vmatprep.mubr.bf16.mxu0 0
    %318 = vmatmul.mubr.bf16.gmra.mrb[0].mxu0 %v154
    %v319 = vpop.f32.mrb[0].mxu0
    %v320 = vadd.f32 %v104, %v319
    %v321 = vpop.f32.mrb[0].mxu0
    %v322 = vadd.f32 %v108, %v321
    %v323 = vpop.f32.mrb[0].mxu0
    %v324 = vadd.f32 %v104, %v323
    %v325 = vpop.f32.mrb[0].mxu0
    %v326 = vadd.f32 %v108, %v325
    %327 = vmatprep.mubr.bf16.mxu0 0
    %328 = vmatmul.mubr.bf16.gmra.mrb[0].mxu0 %v157
    %v329 = vpop.f32.mrb[0].mxu0
    %v330 = vadd.f32 %v104, %v329
    %v331 = vpop.f32.mrb[0].mxu0
    %v332 = vadd.f32 %v108, %v331
    %v333 = vpop.f32.mrb[0].mxu0
    %v334 = vadd.f32 %v104, %v333
    %v335 = vpop.f32.mrb[0].mxu0
    %v336 = vadd.f32 %v108, %v335
    %337 = vmatprep.mubr.bf16.mxu0 0
    %338 = vmatmul.mubr.bf16.gmra.mrb[0].mxu0 %v160
    %v339 = vpop.f32.mrb[0].mxu0
    %v340 = vadd.f32 %v104, %v339
    %v341 = vpop.f32.mrb[0].mxu0
    %v342 = vadd.f32 %v108, %v341
    %v343 = vpop.f32.mrb[0].mxu0
    %v344 = vadd.f32 %v104, %v343
    %v345 = vpop.f32.mrb[0].mxu0
    %v346 = vadd.f32 %v108, %v345
    %347 = vmatprep.mubr.bf16.mxu0 0
    %348 = vmatmul.mubr.bf16.gmra.mrb[0].mxu0 %v163
    %v349 = vpop.f32.mrb[0].mxu0
    %v350 = vadd.f32 %v104, %v349
    %v351 = vpop.f32.mrb[0].mxu0
    %v352 = vadd.f32 %v108, %v351
    %v353 = vpop.f32.mrb[0].mxu0
    %v354 = vadd.f32 %v104, %v353
    %v355 = vpop.f32.mrb[0].mxu0
    %v356 = vadd.f32 %v108, %v355
    %357 = vmatprep.mubr.bf16.mxu0 0
    %358 = vmatmul.mubr.bf16.gmra.mrb[0].mxu0 %v166
    %v359 = vpop.f32.mrb[0].mxu0
    %v360 = vadd.f32 %v104, %v359
    %v361 = vpop.f32.mrb[0].mxu0
    %v362 = vadd.f32 %v108, %v361
    %v363 = vpop.f32.mrb[0].mxu0
    %v364 = vadd.f32 %v104, %v363
    %v365 = vpop.f32.mrb[0].mxu0
    %v366 = vadd.f32 %v108, %v365
    %367 = vdwg.mxu0
    %v368 = vmax.f32 %v210, 0.0
    %v369 = vmax.f32 %v212, 0.0
    %v370 = vmax.f32 %v214, 0.0
    %v371 = vmax.f32 %v216, 0.0
    %v372 = vmax.f32 %v220, 0.0
    %v373 = vmax.f32 %v222, 0.0
    %v374 = vmax.f32 %v224, 0.0
    %v375 = vmax.f32 %v226, 0.0
    %v376 = vmax.f32 %v230, 0.0
    %v377 = vmax.f32 %v232, 0.0
    %v378 = vmax.f32 %v234, 0.0
    %v379 = vmax.f32 %v236, 0.0
    %v380 = vmax.f32 %v240, 0.0
    %v381 = vmax.f32 %v242, 0.0
    %v382 = vmax.f32 %v244, 0.0
    %v383 = vmax.f32 %v246, 0.0
    %v384 = vmax.f32 %v250, 0.0
    %v385 = vmax.f32 %v252, 0.0
    %v386 = vmax.f32 %v254, 0.0
    %v387 = vmax.f32 %v256, 0.0
    %v388 = vmax.f32 %v260, 0.0
    %v389 = vmax.f32 %v262, 0.0
    %v390 = vmax.f32 %v264, 0.0
    %v391 = vmax.f32 %v266, 0.0
    %v392 = vmax.f32 %v270, 0.0
    %v393 = vmax.f32 %v272, 0.0
    %v394 = vmax.f32 %v274, 0.0
    %v395 = vmax.f32 %v276, 0.0
    %v396 = vmax.f32 %v280, 0.0
    %v397 = vmax.f32 %v282, 0.0
    %v398 = vmax.f32 %v284, 0.0
    %v399 = vmax.f32 %v286, 0.0
    %v400 = vmax.f32 %v290, 0.0
    %v401 = vmax.f32 %v292, 0.0
    %v402 = vmax.f32 %v294, 0.0
    %v403 = vmax.f32 %v296, 0.0
    %v404 = vmax.f32 %v300, 0.0
    %v405 = vmax.f32 %v302, 0.0
    %v406 = vmax.f32 %v304, 0.0
    %v407 = vmax.f32 %v306, 0.0
    %v408 = vmax.f32 %v310, 0.0
    %v409 = vmax.f32 %v312, 0.0
    %v410 = vmax.f32 %v314, 0.0
    %v411 = vmax.f32 %v316, 0.0
    %v412 = vmax.f32 %v320, 0.0
    %v413 = vmax.f32 %v322, 0.0
    %v414 = vmax.f32 %v324, 0.0
    %v415 = vmax.f32 %v326, 0.0
    %v416 = vmax.f32 %v330, 0.0
    %v417 = vmax.f32 %v332, 0.0
    %v418 = vmax.f32 %v334, 0.0
    %v419 = vmax.f32 %v336, 0.0
    %v420 = vmax.f32 %v340, 0.0
    %v421 = vmax.f32 %v342, 0.0
    %v422 = vmax.f32 %v344, 0.0
    %v423 = vmax.f32 %v346, 0.0
    %v424 = vmax.f32 %v350, 0.0
    %v425 = vmax.f32 %v352, 0.0
    %v426 = vmax.f32 %v354, 0.0
    %v427 = vmax.f32 %v356, 0.0
    %v428 = vmax.f32 %v360, 0.0
    %v429 = vmax.f32 %v362, 0.0
    %v430 = vmax.f32 %v364, 0.0
    %v431 = vmax.f32 %v366, 0.0
    %v432 = vpack.c.bf16 %v370, %v368
    %v433 = vpack.c.bf16 %v371, %v369
    %v434 = vpack.c.bf16 %v374, %v372
    %v435 = vpack.c.bf16 %v375, %v373
    %v436 = vpack.c.bf16 %v378, %v376
    %v437 = vpack.c.bf16 %v379, %v377
    %v438 = vpack.c.bf16 %v382, %v380
    %v439 = vpack.c.bf16 %v383, %v381
    %v440 = vpack.c.bf16 %v386, %v384
    %v441 = vpack.c.bf16 %v387, %v385
    %v442 = vpack.c.bf16 %v390, %v388
    %v443 = vpack.c.bf16 %v391, %v389
    %v444 = vpack.c.bf16 %v394, %v392
    %v445 = vpack.c.bf16 %v395, %v393
    %v446 = vpack.c.bf16 %v398, %v396
    %v447 = vpack.c.bf16 %v399, %v397
    %v448 = vpack.c.bf16 %v402, %v400
    %v449 = vpack.c.bf16 %v403, %v401
    %v450 = vpack.c.bf16 %v406, %v404
    %v451 = vpack.c.bf16 %v407, %v405
    %v452 = vpack.c.bf16 %v410, %v408
    %v453 = vpack.c.bf16 %v411, %v409
    %v454 = vpack.c.bf16 %v414, %v412
    %v455 = vpack.c.bf16 %v415, %v413
    %v456 = vpack.c.bf16 %v418, %v416
    %v457 = vpack.c.bf16 %v419, %v417
    %v458 = vpack.c.bf16 %v422, %v420
    %v459 = vpack.c.bf16 %v423, %v421
    %v460 = vpack.c.bf16 %v426, %v424
    %v461 = vpack.c.bf16 %v427, %v425
    %v462 = vpack.c.bf16 %v430, %v428
    %v463 = vpack.c.bf16 %v431, %v429
    %v464 = vld [vmem:[%s3] sm:$0xff]
    %v465 = vld [vmem:[%s3 + $0x8] sm:$0xff]
    %v466 = vld [vmem:[%s3 + $0x10] sm:$0xff]
    %v467 = vld [vmem:[%s3 + $0x18] sm:$0xff]
    %v468 = vld [vmem:[%s3 + $0x20] sm:$0xff]
    %v469 = vld [vmem:[%s3 + $0x28] sm:$0xff]
    %v470 = vld [vmem:[%s3 + $0x30] sm:$0xff]
    %v471 = vld [vmem:[%s3 + $0x38] sm:$0xff]
    %v472 = vld [vmem:[%s3 + $0x40] sm:$0xff]
    %v473 = vld [vmem:[%s3 + $0x48] sm:$0xff]
    %v474 = vld [vmem:[%s3 + $0x50] sm:$0xff]
    %v475 = vld [vmem:[%s3 + $0x58] sm:$0xff]
    %v476 = vld [vmem:[%s3 + $0x60] sm:$0xff]
    %v477 = vld [vmem:[%s3 + $0x68] sm:$0xff]
    %v478 = vld [vmem:[%s3 + $0x70] sm:$0xff]
    %v479 = vld [vmem:[%s3 + $0x78] sm:$0xff]
    %v480 = vld [vmem:[%s3 + $0x80] sm:$0xff]
    %v481 = vld [vmem:[%s3 + $0x88] sm:$0xff]
    %v482 = vld [vmem:[%s3 + $0x90] sm:$0xff]
    %v483 = vld [vmem:[%s3 + $0x98] sm:$0xff]
    %v484 = vld [vmem:[%s3 + $0xa0] sm:$0xff]
    %v485 = vld [vmem:[%s3 + $0xa8] sm:$0xff]
    %v486 = vld [vmem:[%s3 + $0xb0] sm:$0xff]
    %v487 = vld [vmem:[%s3 + $0xb8] sm:$0xff]
    %v488 = vld [vmem:[%s3 + $0xc0] sm:$0xff]
    %v489 = vld [vmem:[%s3 + $0xc8] sm:$0xff]
    %v490 = vld [vmem:[%s3 + $0xd0] sm:$0xff]
    %v491 = vld [vmem:[%s3 + $0xd8] sm:$0xff]
    %v492 = vld [vmem:[%s3 + $0xe0] sm:$0xff]
    %v493 = vld [vmem:[%s3 + $0xe8] sm:$0xff]
    %v494 = vld [vmem:[%s3 + $0xf0] sm:$0xff]
    %v495 = vld [vmem:[%s3 + $0xf8] sm:$0xff]
    %v496 = vld [vmem:[%s4] sm:$0x3]
    %v498 = vlaneseq
    %v499 = vshrl.u32 %v498, 7
    %v500 = vsub.s32 0, %v499
    %v501 = vrot.slane %v496, %v500
    %v502 = vlaneseq
    %v503 = vshrl.u32 %v502, 7
    %v504 = vsub.s32 1, %v503
    %v505 = vrot.slane %v496, %v504
    %v540 = vunpack.c.l.b16 %v464
    %v541 = vunpack.c.h.b16 %v464
    %v542 = vunpack.c.l.b16 %v465
    %v543 = vunpack.c.h.b16 %v465
    %v544 = vunpack.c.l.b16 %v466
    %v545 = vunpack.c.h.b16 %v466
    %v546 = vunpack.c.l.b16 %v467
    %v547 = vunpack.c.h.b16 %v467
    %v548 = vunpack.c.l.b16 %v468
    %v549 = vunpack.c.h.b16 %v468
    %v550 = vunpack.c.l.b16 %v469
    %v551 = vunpack.c.h.b16 %v469
    %v552 = vunpack.c.l.b16 %v470
    %v553 = vunpack.c.h.b16 %v470
    %v554 = vunpack.c.l.b16 %v471
    %v555 = vunpack.c.h.b16 %v471
    %v556 = vunpack.c.l.b16 %v472
    %v557 = vunpack.c.h.b16 %v472
    %v558 = vunpack.c.l.b16 %v473
    %v559 = vunpack.c.h.b16 %v473
    %v560 = vunpack.c.l.b16 %v474
    %v561 = vunpack.c.h.b16 %v474
    %v562 = vunpack.c.l.b16 %v475
    %v563 = vunpack.c.h.b16 %v475
    %v564 = vunpack.c.l.b16 %v476
    %v565 = vunpack.c.h.b16 %v476
    %v566 = vunpack.c.l.b16 %v477
    %v567 = vunpack.c.h.b16 %v477
    %v568 = vunpack.c.l.b16 %v478
    %v569 = vunpack.c.h.b16 %v478
    %v570 = vunpack.c.l.b16 %v479
    %v571 = vunpack.c.h.b16 %v479
    %v572 = vunpack.c.l.b16 %v480
    %v573 = vunpack.c.h.b16 %v480
    %v574 = vunpack.c.l.b16 %v481
    %v575 = vunpack.c.h.b16 %v481
    %v576 = vunpack.c.l.b16 %v482
    %v577 = vunpack.c.h.b16 %v482
    %v578 = vunpack.c.l.b16 %v483
    %v579 = vunpack.c.h.b16 %v483
    %v580 = vunpack.c.l.b16 %v484
    %v581 = vunpack.c.h.b16 %v484
    %v582 = vunpack.c.l.b16 %v485
    %v583 = vunpack.c.h.b16 %v485
    %v584 = vunpack.c.l.b16 %v486
    %v585 = vunpack.c.h.b16 %v486
    %v586 = vunpack.c.l.b16 %v487
    %v587 = vunpack.c.h.b16 %v487
    %v588 = vunpack.c.l.b16 %v488
    %v589 = vunpack.c.h.b16 %v488
    %v590 = vunpack.c.l.b16 %v489
    %v591 = vunpack.c.h.b16 %v489
    %v592 = vunpack.c.l.b16 %v490
    %v593 = vunpack.c.h.b16 %v490
    %v594 = vunpack.c.l.b16 %v491
    %v595 = vunpack.c.h.b16 %v491
    %v596 = vunpack.c.l.b16 %v492
    %v597 = vunpack.c.h.b16 %v492
    %v598 = vunpack.c.l.b16 %v493
    %v599 = vunpack.c.h.b16 %v493
    %v600 = vunpack.c.l.b16 %v494
    %v601 = vunpack.c.h.b16 %v494
    %v602 = vunpack.c.l.b16 %v495
    %v603 = vunpack.c.h.b16 %v495
    %v604 = vpack.c.b16 %v542, %v540
    %v605 = vpack.c.b16 %v543, %v541
    %v606 = vpack.c.b16 %v546, %v544
    %v607 = vpack.c.b16 %v547, %v545
    %v608 = vpack.c.b16 %v550, %v548
    %v609 = vpack.c.b16 %v551, %v549
    %v610 = vpack.c.b16 %v554, %v552
    %v611 = vpack.c.b16 %v555, %v553
    %v612 = vpack.c.b16 %v558, %v556
    %v613 = vpack.c.b16 %v559, %v557
    %v614 = vpack.c.b16 %v562, %v560
    %v615 = vpack.c.b16 %v563, %v561
    %v616 = vpack.c.b16 %v566, %v564
    %v617 = vpack.c.b16 %v567, %v565
    %v618 = vpack.c.b16 %v570, %v568
    %v619 = vpack.c.b16 %v571, %v569
    %v620 = vpack.c.b16 %v574, %v572
    %v621 = vpack.c.b16 %v575, %v573
    %v622 = vpack.c.b16 %v578, %v576
    %v623 = vpack.c.b16 %v579, %v577
    %v624 = vpack.c.b16 %v582, %v580
    %v625 = vpack.c.b16 %v583, %v581
    %v626 = vpack.c.b16 %v586, %v584
    %v627 = vpack.c.b16 %v587, %v585
    %v628 = vpack.c.b16 %v590, %v588
    %v629 = vpack.c.b16 %v591, %v589
    %v630 = vpack.c.b16 %v594, %v592
    %v631 = vpack.c.b16 %v595, %v593
    %v632 = vpack.c.b16 %v598, %v596
    %v633 = vpack.c.b16 %v599, %v597
    %v634 = vpack.c.b16 %v602, %v600
    %v635 = vpack.c.b16 %v603, %v601
    %668 = vmatprep.subr.bf16.mxu0 %v605
    %669 = vmatpush1.bf16.msra.mxu0 %v604
    %670 = vmatprep.subr.bf16.mxu0 %v607
    %671 = vmatpush1.bf16.msra.mxu0 %v606
    %672 = vmatprep.subr.bf16.mxu0 %v609
    %673 = vmatpush1.bf16.msra.mxu0 %v608
    %674 = vmatprep.subr.bf16.mxu0 %v611
    %675 = vmatpush1.bf16.msra.mxu0 %v610
    %676 = vmatprep.subr.bf16.mxu0 %v613
    %677 = vmatpush1.bf16.msra.mxu0 %v612
    %678 = vmatprep.subr.bf16.mxu0 %v615
    %679 = vmatpush1.bf16.msra.mxu0 %v614
    %680 = vmatprep.subr.bf16.mxu0 %v617
    %681 = vmatpush1.bf16.msra.mxu0 %v616
    %682 = vmatprep.subr.bf16.mxu0 %v619
    %683 = vmatpush1.bf16.msra.mxu0 %v618
    %684 = vmatprep.subr.bf16.mxu0 %v621
    %685 = vmatpush1.bf16.msra.mxu0 %v620
    %686 = vmatprep.subr.bf16.mxu0 %v623
    %687 = vmatpush1.bf16.msra.mxu0 %v622
    %688 = vmatprep.subr.bf16.mxu0 %v625
    %689 = vmatpush1.bf16.msra.mxu0 %v624
    %690 = vmatprep.subr.bf16.mxu0 %v627
    %691 = vmatpush1.bf16.msra.mxu0 %v626
    %692 = vmatprep.subr.bf16.mxu0 %v629
    %693 = vmatpush1.bf16.msra.mxu0 %v628
    %694 = vmatprep.subr.bf16.mxu0 %v631
    %695 = vmatpush1.bf16.msra.mxu0 %v630
    %696 = vmatprep.subr.bf16.mxu0 %v633
    %697 = vmatpush1.bf16.msra.mxu0 %v632
    %698 = vmatprep.subr.bf16.mxu0 %v635
    %699 = vmatpush1.bf16.msra.mxu0 %v634
    %700 = vmatprep.mubr.bf16.mxu0 %v433
    %701 = vmatmul.mubr.bf16.gmra.mrb[0].mxu0 %v432
    %v702 = vpop.f32.mrb[0].mxu0
    %v703 = vadd.f32 %v501, %v702
    %v704 = vpop.f32.mrb[0].mxu0
    %v705 = vadd.f32 %v505, %v704
    %v706 = vpop.f32.mrb[0].mxu0
    %v707 = vadd.f32 %v501, %v706
    %v708 = vpop.f32.mrb[0].mxu0
    %v709 = vadd.f32 %v505, %v708
    %710 = vmatprep.mubr.bf16.mxu0 %v435
    %711 = vmatmul.mubr.bf16.gmra.mrb[0].mxu0 %v434
    %v712 = vpop.f32.mrb[0].mxu0
    %v713 = vadd.f32 %v501, %v712
    %v714 = vpop.f32.mrb[0].mxu0
    %v715 = vadd.f32 %v505, %v714
    %v716 = vpop.f32.mrb[0].mxu0
    %v717 = vadd.f32 %v501, %v716
    %v718 = vpop.f32.mrb[0].mxu0
    %v719 = vadd.f32 %v505, %v718
    %720 = vmatprep.mubr.bf16.mxu0 %v437
    %721 = vmatmul.mubr.bf16.gmra.mrb[0].mxu0 %v436
    %v722 = vpop.f32.mrb[0].mxu0
    %v723 = vadd.f32 %v501, %v722
    %v724 = vpop.f32.mrb[0].mxu0
    %v725 = vadd.f32 %v505, %v724
    %v726 = vpop.f32.mrb[0].mxu0
    %v727 = vadd.f32 %v501, %v726
    %v728 = vpop.f32.mrb[0].mxu0
    %v729 = vadd.f32 %v505, %v728
    %730 = vmatprep.mubr.bf16.mxu0 %v439
    %731 = vmatmul.mubr.bf16.gmra.mrb[0].mxu0 %v438
    %v732 = vpop.f32.mrb[0].mxu0
    %v733 = vadd.f32 %v501, %v732
    %v734 = vpop.f32.mrb[0].mxu0
    %v735 = vadd.f32 %v505, %v734
    %v736 = vpop.f32.mrb[0].mxu0
    %v737 = vadd.f32 %v501, %v736
    %v738 = vpop.f32.mrb[0].mxu0
    %v739 = vadd.f32 %v505, %v738
    %740 = vmatprep.mubr.bf16.mxu0 %v441
    %741 = vmatmul.mubr.bf16.gmra.mrb[0].mxu0 %v440
    %v742 = vpop.f32.mrb[0].mxu0
    %v743 = vadd.f32 %v501, %v742
    %v744 = vpop.f32.mrb[0].mxu0
    %v745 = vadd.f32 %v505, %v744
    %v746 = vpop.f32.mrb[0].mxu0
    %v747 = vadd.f32 %v501, %v746
    %v748 = vpop.f32.mrb[0].mxu0
    %v749 = vadd.f32 %v505, %v748
    %750 = vmatprep.mubr.bf16.mxu0 %v443
    %751 = vmatmul.mubr.bf16.gmra.mrb[0].mxu0 %v442
    %v752 = vpop.f32.mrb[0].mxu0
    %v753 = vadd.f32 %v501, %v752
    %v754 = vpop.f32.mrb[0].mxu0
    %v755 = vadd.f32 %v505, %v754
    %v756 = vpop.f32.mrb[0].mxu0
    %v757 = vadd.f32 %v501, %v756
    %v758 = vpop.f32.mrb[0].mxu0
    %v759 = vadd.f32 %v505, %v758
    %760 = vmatprep.mubr.bf16.mxu0 %v445
    %761 = vmatmul.mubr.bf16.gmra.mrb[0].mxu0 %v444
    %v762 = vpop.f32.mrb[0].mxu0
    %v763 = vadd.f32 %v501, %v762
    %v764 = vpop.f32.mrb[0].mxu0
    %v765 = vadd.f32 %v505, %v764
    %v766 = vpop.f32.mrb[0].mxu0
    %v767 = vadd.f32 %v501, %v766
    %v768 = vpop.f32.mrb[0].mxu0
    %v769 = vadd.f32 %v505, %v768
    %770 = vmatprep.mubr.bf16.mxu0 %v447
    %771 = vmatmul.mubr.bf16.gmra.mrb[0].mxu0 %v446
    %v772 = vpop.f32.mrb[0].mxu0
    %v773 = vadd.f32 %v501, %v772
    %v774 = vpop.f32.mrb[0].mxu0
    %v775 = vadd.f32 %v505, %v774
    %v776 = vpop.f32.mrb[0].mxu0
    %v777 = vadd.f32 %v501, %v776
    %v778 = vpop.f32.mrb[0].mxu0
    %v779 = vadd.f32 %v505, %v778
    %780 = vmatprep.mubr.bf16.mxu0 %v449
    %781 = vmatmul.mubr.bf16.gmra.mrb[0].mxu0 %v448
    %v782 = vpop.f32.mrb[0].mxu0
    %v783 = vadd.f32 %v501, %v782
    %v784 = vpop.f32.mrb[0].mxu0
    %v785 = vadd.f32 %v505, %v784
    %v786 = vpop.f32.mrb[0].mxu0
    %v787 = vadd.f32 %v501, %v786
    %v788 = vpop.f32.mrb[0].mxu0
    %v789 = vadd.f32 %v505, %v788
    %790 = vmatprep.mubr.bf16.mxu0 %v451
    %791 = vmatmul.mubr.bf16.gmra.mrb[0].mxu0 %v450
    %v792 = vpop.f32.mrb[0].mxu0
    %v793 = vadd.f32 %v501, %v792
    %v794 = vpop.f32.mrb[0].mxu0
    %v795 = vadd.f32 %v505, %v794
    %v796 = vpop.f32.mrb[0].mxu0
    %v797 = vadd.f32 %v501, %v796
    %v798 = vpop.f32.mrb[0].mxu0
    %v799 = vadd.f32 %v505, %v798
    %800 = vmatprep.mubr.bf16.mxu0 %v453
    %801 = vmatmul.mubr.bf16.gmra.mrb[0].mxu0 %v452
    %v802 = vpop.f32.mrb[0].mxu0
    %v803 = vadd.f32 %v501, %v802
    %v804 = vpop.f32.mrb[0].mxu0
    %v805 = vadd.f32 %v505, %v804
    %v806 = vpop.f32.mrb[0].mxu0
    %v807 = vadd.f32 %v501, %v806
    %v808 = vpop.f32.mrb[0].mxu0
    %v809 = vadd.f32 %v505, %v808
    %810 = vmatprep.mubr.bf16.mxu0 %v455
    %811 = vmatmul.mubr.bf16.gmra.mrb[0].mxu0 %v454
    %v812 = vpop.f32.mrb[0].mxu0
    %v813 = vadd.f32 %v501, %v812
    %v814 = vpop.f32.mrb[0].mxu0
    %v815 = vadd.f32 %v505, %v814
    %v816 = vpop.f32.mrb[0].mxu0
    %v817 = vadd.f32 %v501, %v816
    %v818 = vpop.f32.mrb[0].mxu0
    %v819 = vadd.f32 %v505, %v818
    %820 = vmatprep.mubr.bf16.mxu0 %v457
    %821 = vmatmul.mubr.bf16.gmra.mrb[0].mxu0 %v456
    %v822 = vpop.f32.mrb[0].mxu0
    %v823 = vadd.f32 %v501, %v822
    %v824 = vpop.f32.mrb[0].mxu0
    %v825 = vadd.f32 %v505, %v824
    %v826 = vpop.f32.mrb[0].mxu0
    %v827 = vadd.f32 %v501, %v826
    %v828 = vpop.f32.mrb[0].mxu0
    %v829 = vadd.f32 %v505, %v828
    %830 = vmatprep.mubr.bf16.mxu0 %v459
    %831 = vmatmul.mubr.bf16.gmra.mrb[0].mxu0 %v458
    %v832 = vpop.f32.mrb[0].mxu0
    %v833 = vadd.f32 %v501, %v832
    %v834 = vpop.f32.mrb[0].mxu0
    %v835 = vadd.f32 %v505, %v834
    %v836 = vpop.f32.mrb[0].mxu0
    %v837 = vadd.f32 %v501, %v836
    %v838 = vpop.f32.mrb[0].mxu0
    %v839 = vadd.f32 %v505, %v838
    %840 = vmatprep.mubr.bf16.mxu0 %v461
    %841 = vmatmul.mubr.bf16.gmra.mrb[0].mxu0 %v460
    %v842 = vpop.f32.mrb[0].mxu0
    %v843 = vadd.f32 %v501, %v842
    %v844 = vpop.f32.mrb[0].mxu0
    %v845 = vadd.f32 %v505, %v844
    %v846 = vpop.f32.mrb[0].mxu0
    %v847 = vadd.f32 %v501, %v846
    %v848 = vpop.f32.mrb[0].mxu0
    %v849 = vadd.f32 %v505, %v848
    %850 = vmatprep.mubr.bf16.mxu0 %v463
    %851 = vmatmul.mubr.bf16.gmra.mrb[0].mxu0 %v462
    %v852 = vpop.f32.mrb[0].mxu0
    %v853 = vadd.f32 %v501, %v852
    %v854 = vpop.f32.mrb[0].mxu0
    %v855 = vadd.f32 %v505, %v854
    %v856 = vpop.f32.mrb[0].mxu0
    %v857 = vadd.f32 %v501, %v856
    %v858 = vpop.f32.mrb[0].mxu0
    %v859 = vadd.f32 %v505, %v858
    %860 = vdwg.mxu0
    %v861 = vmax.f32 %v703, 0.0
    %v862 = vmax.f32 %v705, 0.0
    %v863 = vmax.f32 %v707, 0.0
    %v864 = vmax.f32 %v709, 0.0
    %v865 = vmax.f32 %v713, 0.0
    %v866 = vmax.f32 %v715, 0.0
    %v867 = vmax.f32 %v717, 0.0
    %v868 = vmax.f32 %v719, 0.0
    %v869 = vmax.f32 %v723, 0.0
    %v870 = vmax.f32 %v725, 0.0
    %v871 = vmax.f32 %v727, 0.0
    %v872 = vmax.f32 %v729, 0.0
    %v873 = vmax.f32 %v733, 0.0
    %v874 = vmax.f32 %v735, 0.0
    %v875 = vmax.f32 %v737, 0.0
    %v876 = vmax.f32 %v739, 0.0
    %v877 = vmax.f32 %v743, 0.0
    %v878 = vmax.f32 %v745, 0.0
    %v879 = vmax.f32 %v747, 0.0
    %v880 = vmax.f32 %v749, 0.0
    %v881 = vmax.f32 %v753, 0.0
    %v882 = vmax.f32 %v755, 0.0
    %v883 = vmax.f32 %v757, 0.0
    %v884 = vmax.f32 %v759, 0.0
    %v885 = vmax.f32 %v763, 0.0
    %v886 = vmax.f32 %v765, 0.0
    %v887 = vmax.f32 %v767, 0.0
    %v888 = vmax.f32 %v769, 0.0
    %v889 = vmax.f32 %v773, 0.0
    %v890 = vmax.f32 %v775, 0.0
    %v891 = vmax.f32 %v777, 0.0
    %v892 = vmax.f32 %v779, 0.0
    %v893 = vmax.f32 %v783, 0.0
    %v894 = vmax.f32 %v785, 0.0
    %v895 = vmax.f32 %v787, 0.0
    %v896 = vmax.f32 %v789, 0.0
    %v897 = vmax.f32 %v793, 0.0
    %v898 = vmax.f32 %v795, 0.0
    %v899 = vmax.f32 %v797, 0.0
    %v900 = vmax.f32 %v799, 0.0
    %v901 = vmax.f32 %v803, 0.0
    %v902 = vmax.f32 %v805, 0.0
    %v903 = vmax.f32 %v807, 0.0
    %v904 = vmax.f32 %v809, 0.0
    %v905 = vmax.f32 %v813, 0.0
    %v906 = vmax.f32 %v815, 0.0
    %v907 = vmax.f32 %v817, 0.0
    %v908 = vmax.f32 %v819, 0.0
    %v909 = vmax.f32 %v823, 0.0
    %v910 = vmax.f32 %v825, 0.0
    %v911 = vmax.f32 %v827, 0.0
    %v912 = vmax.f32 %v829, 0.0
    %v913 = vmax.f32 %v833, 0.0
    %v914 = vmax.f32 %v835, 0.0
    %v915 = vmax.f32 %v837, 0.0
    %v916 = vmax.f32 %v839, 0.0
    %v917 = vmax.f32 %v843, 0.0
    %v918 = vmax.f32 %v845, 0.0
    %v919 = vmax.f32 %v847, 0.0
    %v920 = vmax.f32 %v849, 0.0
    %v921 = vmax.f32 %v853, 0.0
    %v922 = vmax.f32 %v855, 0.0
    %v923 = vmax.f32 %v857, 0.0
    %v924 = vmax.f32 %v859, 0.0
    %v925 = vpack.c.bf16 %v863, %v861
    %v926 = vpack.c.bf16 %v864, %v862
    %v927 = vpack.c.bf16 %v867, %v865
    %v928 = vpack.c.bf16 %v868, %v866
    %v929 = vpack.c.bf16 %v871, %v869
    %v930 = vpack.c.bf16 %v872, %v870
    %v931 = vpack.c.bf16 %v875, %v873
    %v932 = vpack.c.bf16 %v876, %v874
    %v933 = vpack.c.bf16 %v879, %v877
    %v934 = vpack.c.bf16 %v880, %v878
    %v935 = vpack.c.bf16 %v883, %v881
    %v936 = vpack.c.bf16 %v884, %v882
    %v937 = vpack.c.bf16 %v887, %v885
    %v938 = vpack.c.bf16 %v888, %v886
    %v939 = vpack.c.bf16 %v891, %v889
    %v940 = vpack.c.bf16 %v892, %v890
    %v941 = vpack.c.bf16 %v895, %v893
    %v942 = vpack.c.bf16 %v896, %v894
    %v943 = vpack.c.bf16 %v899, %v897
    %v944 = vpack.c.bf16 %v900, %v898
    %v945 = vpack.c.bf16 %v903, %v901
    %v946 = vpack.c.bf16 %v904, %v902
    %v947 = vpack.c.bf16 %v907, %v905
    %v948 = vpack.c.bf16 %v908, %v906
    %v949 = vpack.c.bf16 %v911, %v909
    %v950 = vpack.c.bf16 %v912, %v910
    %v951 = vpack.c.bf16 %v915, %v913
    %v952 = vpack.c.bf16 %v916, %v914
    %v953 = vpack.c.bf16 %v919, %v917
    %v954 = vpack.c.bf16 %v920, %v918
    %v955 = vpack.c.bf16 %v923, %v921
    %v956 = vpack.c.bf16 %v924, %v922
    %v957 = vld [vmem:[#allocation3] sm:$0xff]
    %v958 = vld [vmem:[#allocation3 + $0x8] sm:$0xff]
    %v959 = vld [vmem:[#allocation3 + $0x10] sm:$0xff]
    %v960 = vld [vmem:[#allocation3 + $0x18] sm:$0xff]
    %v961 = vld [vmem:[#allocation3 + $0x20] sm:$0xff]
    %v962 = vld [vmem:[#allocation3 + $0x28] sm:$0xff]
    %v963 = vld [vmem:[#allocation3 + $0x30] sm:$0xff]
    %v964 = vld [vmem:[#allocation3 + $0x38] sm:$0xff]
    %v965 = vld [vmem:[#allocation3 + $0x40] sm:$0xff]
    %v966 = vld [vmem:[#allocation3 + $0x48] sm:$0xff]
    %v967 = vld [vmem:[#allocation3 + $0x50] sm:$0xff]
    %v968 = vld [vmem:[#allocation3 + $0x58] sm:$0xff]
    %v969 = vld [vmem:[#allocation3 + $0x60] sm:$0xff]
    %v970 = vld [vmem:[#allocation3 + $0x68] sm:$0xff]
    %v971 = vld [vmem:[#allocation3 + $0x70] sm:$0xff]
    %v972 = vld [vmem:[#allocation3 + $0x78] sm:$0xff]
    %v973 = vld [vmem:[#allocation3 + $0x80] sm:$0xff]
    %v974 = vld [vmem:[#allocation3 + $0x88] sm:$0xff]
    %v975 = vld [vmem:[#allocation3 + $0x90] sm:$0xff]
    %v976 = vld [vmem:[#allocation3 + $0x98] sm:$0xff]
    %v977 = vld [vmem:[#allocation3 + $0xa0] sm:$0xff]
    %v978 = vld [vmem:[#allocation3 + $0xa8] sm:$0xff]
    %v979 = vld [vmem:[#allocation3 + $0xb0] sm:$0xff]
    %v980 = vld [vmem:[#allocation3 + $0xb8] sm:$0xff]
    %v981 = vld [vmem:[#allocation3 + $0xc0] sm:$0xff]
    %v982 = vld [vmem:[#allocation3 + $0xc8] sm:$0xff]
    %v983 = vld [vmem:[#allocation3 + $0xd0] sm:$0xff]
    %v984 = vld [vmem:[#allocation3 + $0xd8] sm:$0xff]
    %v985 = vld [vmem:[#allocation3 + $0xe0] sm:$0xff]
    %v986 = vld [vmem:[#allocation3 + $0xe8] sm:$0xff]
    %v987 = vld [vmem:[#allocation3 + $0xf0] sm:$0xff]
    %v988 = vld [vmem:[#allocation3 + $0xf8] sm:$0xff]
    %v989 = vld [vmem:[%s6] sm:$0x3]
    %v991 = vlaneseq
    %v992 = vshrl.u32 %v991, 7
    %v993 = vsub.s32 0, %v992
    %v994 = vrot.slane %v989, %v993
    %v995 = vlaneseq
    %v996 = vshrl.u32 %v995, 7
    %v997 = vsub.s32 1, %v996
    %v998 = vrot.slane %v989, %v997
    %v1033 = vunpack.c.l.b16 %v957
    %v1034 = vunpack.c.h.b16 %v957
    %v1035 = vunpack.c.l.b16 %v958
    %v1036 = vunpack.c.h.b16 %v958
    %v1037 = vunpack.c.l.b16 %v959
    %v1038 = vunpack.c.h.b16 %v959
    %v1039 = vunpack.c.l.b16 %v960
    %v1040 = vunpack.c.h.b16 %v960
    %v1041 = vunpack.c.l.b16 %v961
    %v1042 = vunpack.c.h.b16 %v961
    %v1043 = vunpack.c.l.b16 %v962
    %v1044 = vunpack.c.h.b16 %v962
    %v1045 = vunpack.c.l.b16 %v963
    %v1046 = vunpack.c.h.b16 %v963
    %v1047 = vunpack.c.l.b16 %v964
    %v1048 = vunpack.c.h.b16 %v964
    %v1049 = vunpack.c.l.b16 %v965
    %v1050 = vunpack.c.h.b16 %v965
    %v1051 = vunpack.c.l.b16 %v966
    %v1052 = vunpack.c.h.b16 %v966
    %v1053 = vunpack.c.l.b16 %v967
    %v1054 = vunpack.c.h.b16 %v967
    %v1055 = vunpack.c.l.b16 %v968
    %v1056 = vunpack.c.h.b16 %v968
    %v1057 = vunpack.c.l.b16 %v969
    %v1058 = vunpack.c.h.b16 %v969
    %v1059 = vunpack.c.l.b16 %v970
    %v1060 = vunpack.c.h.b16 %v970
    %v1061 = vunpack.c.l.b16 %v971
    %v1062 = vunpack.c.h.b16 %v971
    %v1063 = vunpack.c.l.b16 %v972
    %v1064 = vunpack.c.h.b16 %v972
    %v1065 = vunpack.c.l.b16 %v973
    %v1066 = vunpack.c.h.b16 %v973
    %v1067 = vunpack.c.l.b16 %v974
    %v1068 = vunpack.c.h.b16 %v974
    %v1069 = vunpack.c.l.b16 %v975
    %v1070 = vunpack.c.h.b16 %v975
    %v1071 = vunpack.c.l.b16 %v976
    %v1072 = vunpack.c.h.b16 %v976
    %v1073 = vunpack.c.l.b16 %v977
    %v1074 = vunpack.c.h.b16 %v977
    %v1075 = vunpack.c.l.b16 %v978
    %v1076 = vunpack.c.h.b16 %v978
    %v1077 = vunpack.c.l.b16 %v979
    %v1078 = vunpack.c.h.b16 %v979
    %v1079 = vunpack.c.l.b16 %v980
    %v1080 = vunpack.c.h.b16 %v980
    %v1081 = vunpack.c.l.b16 %v981
    %v1082 = vunpack.c.h.b16 %v981
    %v1083 = vunpack.c.l.b16 %v982
    %v1084 = vunpack.c.h.b16 %v982
    %v1085 = vunpack.c.l.b16 %v983
    %v1086 = vunpack.c.h.b16 %v983
    %v1087 = vunpack.c.l.b16 %v984
    %v1088 = vunpack.c.h.b16 %v984
    %v1089 = vunpack.c.l.b16 %v985
    %v1090 = vunpack.c.h.b16 %v985
    %v1091 = vunpack.c.l.b16 %v986
    %v1092 = vunpack.c.h.b16 %v986
    %v1093 = vunpack.c.l.b16 %v987
    %v1094 = vunpack.c.h.b16 %v987
    %v1095 = vunpack.c.l.b16 %v988
    %v1096 = vunpack.c.h.b16 %v988
    %v1097 = vpack.c.b16 %v1035, %v1033
    %v1098 = vpack.c.b16 %v1036, %v1034
    %v1099 = vpack.c.b16 %v1039, %v1037
    %v1100 = vpack.c.b16 %v1040, %v1038
    %v1101 = vpack.c.b16 %v1043, %v1041
    %v1102 = vpack.c.b16 %v1044, %v1042
    %v1103 = vpack.c.b16 %v1047, %v1045
    %v1104 = vpack.c.b16 %v1048, %v1046
    %v1105 = vpack.c.b16 %v1051, %v1049
    %v1106 = vpack.c.b16 %v1052, %v1050
    %v1107 = vpack.c.b16 %v1055, %v1053
    %v1108 = vpack.c.b16 %v1056, %v1054
    %v1109 = vpack.c.b16 %v1059, %v1057
    %v1110 = vpack.c.b16 %v1060, %v1058
    %v1111 = vpack.c.b16 %v1063, %v1061
    %v1112 = vpack.c.b16 %v1064, %v1062
    %v1113 = vpack.c.b16 %v1067, %v1065
    %v1114 = vpack.c.b16 %v1068, %v1066
    %v1115 = vpack.c.b16 %v1071, %v1069
    %v1116 = vpack.c.b16 %v1072, %v1070
    %v1117 = vpack.c.b16 %v1075, %v1073
    %v1118 = vpack.c.b16 %v1076, %v1074
    %v1119 = vpack.c.b16 %v1079, %v1077
    %v1120 = vpack.c.b16 %v1080, %v1078
    %v1121 = vpack.c.b16 %v1083, %v1081
    %v1122 = vpack.c.b16 %v1084, %v1082
    %v1123 = vpack.c.b16 %v1087, %v1085
    %v1124 = vpack.c.b16 %v1088, %v1086
    %v1125 = vpack.c.b16 %v1091, %v1089
    %v1126 = vpack.c.b16 %v1092, %v1090
    %v1127 = vpack.c.b16 %v1095, %v1093
    %v1128 = vpack.c.b16 %v1096, %v1094
    %1161 = vmatprep.subr.bf16.mxu0 %v1098
    %1162 = vmatpush1.bf16.msra.mxu0 %v1097
    %1163 = vmatprep.subr.bf16.mxu0 %v1100
    %1164 = vmatpush1.bf16.msra.mxu0 %v1099
    %1165 = vmatprep.subr.bf16.mxu0 %v1102
    %1166 = vmatpush1.bf16.msra.mxu0 %v1101
    %1167 = vmatprep.subr.bf16.mxu0 %v1104
    %1168 = vmatpush1.bf16.msra.mxu0 %v1103
    %1169 = vmatprep.subr.bf16.mxu0 %v1106
    %1170 = vmatpush1.bf16.msra.mxu0 %v1105
    %1171 = vmatprep.subr.bf16.mxu0 %v1108
    %1172 = vmatpush1.bf16.msra.mxu0 %v1107
    %1173 = vmatprep.subr.bf16.mxu0 %v1110
    %1174 = vmatpush1.bf16.msra.mxu0 %v1109
    %1175 = vmatprep.subr.bf16.mxu0 %v1112
    %1176 = vmatpush1.bf16.msra.mxu0 %v1111
    %1177 = vmatprep.subr.bf16.mxu0 %v1114
    %1178 = vmatpush1.bf16.msra.mxu0 %v1113
    %1179 = vmatprep.subr.bf16.mxu0 %v1116
    %1180 = vmatpush1.bf16.msra.mxu0 %v1115
    %1181 = vmatprep.subr.bf16.mxu0 %v1118
    %1182 = vmatpush1.bf16.msra.mxu0 %v1117
    %1183 = vmatprep.subr.bf16.mxu0 %v1120
    %1184 = vmatpush1.bf16.msra.mxu0 %v1119
    %1185 = vmatprep.subr.bf16.mxu0 %v1122
    %1186 = vmatpush1.bf16.msra.mxu0 %v1121
    %1187 = vmatprep.subr.bf16.mxu0 %v1124
    %1188 = vmatpush1.bf16.msra.mxu0 %v1123
    %1189 = vmatprep.subr.bf16.mxu0 %v1126
    %1190 = vmatpush1.bf16.msra.mxu0 %v1125
    %1191 = vmatprep.subr.bf16.mxu0 %v1128
    %1192 = vmatpush1.bf16.msra.mxu0 %v1127
    %1193 = vmatprep.mubr.bf16.mxu0 %v926
    %1194 = vmatmul.mubr.bf16.gmra.mrb[0].mxu0 %v925
    %v1195 = vpop.f32.mrb[0].mxu0
    %v1196 = vadd.f32 %v994, %v1195
    %v1197 = vpop.f32.mrb[0].mxu0
    %v1198 = vadd.f32 %v998, %v1197
    %v1199 = vpop.f32.mrb[0].mxu0
    %v1200 = vadd.f32 %v994, %v1199
    %v1201 = vpop.f32.mrb[0].mxu0
    %v1202 = vadd.f32 %v998, %v1201
    %1203 = vmatprep.mubr.bf16.mxu0 %v928
    %1204 = vmatmul.mubr.bf16.gmra.mrb[0].mxu0 %v927
    %v1205 = vpop.f32.mrb[0].mxu0
    %v1206 = vadd.f32 %v994, %v1205
    %v1207 = vpop.f32.mrb[0].mxu0
    %v1208 = vadd.f32 %v998, %v1207
    %v1209 = vpop.f32.mrb[0].mxu0
    %v1210 = vadd.f32 %v994, %v1209
    %v1211 = vpop.f32.mrb[0].mxu0
    %v1212 = vadd.f32 %v998, %v1211
    %1213 = vmatprep.mubr.bf16.mxu0 %v930
    %1214 = vmatmul.mubr.bf16.gmra.mrb[0].mxu0 %v929
    %v1215 = vpop.f32.mrb[0].mxu0
    %v1216 = vadd.f32 %v994, %v1215
    %v1217 = vpop.f32.mrb[0].mxu0
    %v1218 = vadd.f32 %v998, %v1217
    %v1219 = vpop.f32.mrb[0].mxu0
    %v1220 = vadd.f32 %v994, %v1219
    %v1221 = vpop.f32.mrb[0].mxu0
    %v1222 = vadd.f32 %v998, %v1221
    %1223 = vmatprep.mubr.bf16.mxu0 %v932
    %1224 = vmatmul.mubr.bf16.gmra.mrb[0].mxu0 %v931
    %v1225 = vpop.f32.mrb[0].mxu0
    %v1226 = vadd.f32 %v994, %v1225
    %v1227 = vpop.f32.mrb[0].mxu0
    %v1228 = vadd.f32 %v998, %v1227
    %v1229 = vpop.f32.mrb[0].mxu0
    %v1230 = vadd.f32 %v994, %v1229
    %v1231 = vpop.f32.mrb[0].mxu0
    %v1232 = vadd.f32 %v998, %v1231
    %1233 = vmatprep.mubr.bf16.mxu0 %v934
    %1234 = vmatmul.mubr.bf16.gmra.mrb[0].mxu0 %v933
    %v1235 = vpop.f32.mrb[0].mxu0
    %v1236 = vadd.f32 %v994, %v1235
    %v1237 = vpop.f32.mrb[0].mxu0
    %v1238 = vadd.f32 %v998, %v1237
    %v1239 = vpop.f32.mrb[0].mxu0
    %v1240 = vadd.f32 %v994, %v1239
    %v1241 = vpop.f32.mrb[0].mxu0
    %v1242 = vadd.f32 %v998, %v1241
    %1243 = vmatprep.mubr.bf16.mxu0 %v936
    %1244 = vmatmul.mubr.bf16.gmra.mrb[0].mxu0 %v935
    %v1245 = vpop.f32.mrb[0].mxu0
    %v1246 = vadd.f32 %v994, %v1245
    %v1247 = vpop.f32.mrb[0].mxu0
    %v1248 = vadd.f32 %v998, %v1247
    %v1249 = vpop.f32.mrb[0].mxu0
    %v1250 = vadd.f32 %v994, %v1249
    %v1251 = vpop.f32.mrb[0].mxu0
    %v1252 = vadd.f32 %v998, %v1251
    %1253 = vmatprep.mubr.bf16.mxu0 %v938
    %1254 = vmatmul.mubr.bf16.gmra.mrb[0].mxu0 %v937
    %v1255 = vpop.f32.mrb[0].mxu0
    %v1256 = vadd.f32 %v994, %v1255
    %v1257 = vpop.f32.mrb[0].mxu0
    %v1258 = vadd.f32 %v998, %v1257
    %v1259 = vpop.f32.mrb[0].mxu0
    %v1260 = vadd.f32 %v994, %v1259
    %v1261 = vpop.f32.mrb[0].mxu0
    %v1262 = vadd.f32 %v998, %v1261
    %1263 = vmatprep.mubr.bf16.mxu0 %v940
    %1264 = vmatmul.mubr.bf16.gmra.mrb[0].mxu0 %v939
    %v1265 = vpop.f32.mrb[0].mxu0
    %v1266 = vadd.f32 %v994, %v1265
    %v1267 = vpop.f32.mrb[0].mxu0
    %v1268 = vadd.f32 %v998, %v1267
    %v1269 = vpop.f32.mrb[0].mxu0
    %v1270 = vadd.f32 %v994, %v1269
    %v1271 = vpop.f32.mrb[0].mxu0
    %v1272 = vadd.f32 %v998, %v1271
    %1273 = vmatprep.mubr.bf16.mxu0 %v942
    %1274 = vmatmul.mubr.bf16.gmra.mrb[0].mxu0 %v941
    %v1275 = vpop.f32.mrb[0].mxu0
    %v1276 = vadd.f32 %v994, %v1275
    %v1277 = vpop.f32.mrb[0].mxu0
    %v1278 = vadd.f32 %v998, %v1277
    %v1279 = vpop.f32.mrb[0].mxu0
    %v1280 = vadd.f32 %v994, %v1279
    %v1281 = vpop.f32.mrb[0].mxu0
    %v1282 = vadd.f32 %v998, %v1281
    %1283 = vmatprep.mubr.bf16.mxu0 %v944
    %1284 = vmatmul.mubr.bf16.gmra.mrb[0].mxu0 %v943
    %v1285 = vpop.f32.mrb[0].mxu0
    %v1286 = vadd.f32 %v994, %v1285
    %v1287 = vpop.f32.mrb[0].mxu0
    %v1288 = vadd.f32 %v998, %v1287
    %v1289 = vpop.f32.mrb[0].mxu0
    %v1290 = vadd.f32 %v994, %v1289
    %v1291 = vpop.f32.mrb[0].mxu0
    %v1292 = vadd.f32 %v998, %v1291
    %1293 = vmatprep.mubr.bf16.mxu0 %v946
    %1294 = vmatmul.mubr.bf16.gmra.mrb[0].mxu0 %v945
    %v1295 = vpop.f32.mrb[0].mxu0
    %v1296 = vadd.f32 %v994, %v1295
    %v1297 = vpop.f32.mrb[0].mxu0
    %v1298 = vadd.f32 %v998, %v1297
    %v1299 = vpop.f32.mrb[0].mxu0
    %v1300 = vadd.f32 %v994, %v1299
    %v1301 = vpop.f32.mrb[0].mxu0
    %v1302 = vadd.f32 %v998, %v1301
    %1303 = vmatprep.mubr.bf16.mxu0 %v948
    %1304 = vmatmul.mubr.bf16.gmra.mrb[0].mxu0 %v947
    %v1305 = vpop.f32.mrb[0].mxu0
    %v1306 = vadd.f32 %v994, %v1305
    %v1307 = vpop.f32.mrb[0].mxu0
    %v1308 = vadd.f32 %v998, %v1307
    %v1309 = vpop.f32.mrb[0].mxu0
    %v1310 = vadd.f32 %v994, %v1309
    %v1311 = vpop.f32.mrb[0].mxu0
    %v1312 = vadd.f32 %v998, %v1311
    %1313 = vmatprep.mubr.bf16.mxu0 %v950
    %1314 = vmatmul.mubr.bf16.gmra.mrb[0].mxu0 %v949
    %v1315 = vpop.f32.mrb[0].mxu0
    %v1316 = vadd.f32 %v994, %v1315
    %v1317 = vpop.f32.mrb[0].mxu0
    %v1318 = vadd.f32 %v998, %v1317
    %v1319 = vpop.f32.mrb[0].mxu0
    %v1320 = vadd.f32 %v994, %v1319
    %v1321 = vpop.f32.mrb[0].mxu0
    %v1322 = vadd.f32 %v998, %v1321
    %1323 = vmatprep.mubr.bf16.mxu0 %v952
    %1324 = vmatmul.mubr.bf16.gmra.mrb[0].mxu0 %v951
    %v1325 = vpop.f32.mrb[0].mxu0
    %v1326 = vadd.f32 %v994, %v1325
    %v1327 = vpop.f32.mrb[0].mxu0
    %v1328 = vadd.f32 %v998, %v1327
    %v1329 = vpop.f32.mrb[0].mxu0
    %v1330 = vadd.f32 %v994, %v1329
    %v1331 = vpop.f32.mrb[0].mxu0
    %v1332 = vadd.f32 %v998, %v1331
    %1333 = vmatprep.mubr.bf16.mxu0 %v954
    %1334 = vmatmul.mubr.bf16.gmra.mrb[0].mxu0 %v953
    %v1335 = vpop.f32.mrb[0].mxu0
    %v1336 = vadd.f32 %v994, %v1335
    %v1337 = vpop.f32.mrb[0].mxu0
    %v1338 = vadd.f32 %v998, %v1337
    %v1339 = vpop.f32.mrb[0].mxu0
    %v1340 = vadd.f32 %v994, %v1339
    %v1341 = vpop.f32.mrb[0].mxu0
    %v1342 = vadd.f32 %v998, %v1341
    %1343 = vmatprep.mubr.bf16.mxu0 %v956
    %1344 = vmatmul.mubr.bf16.gmra.mrb[0].mxu0 %v955
    %v1345 = vpop.f32.mrb[0].mxu0
    %v1346 = vadd.f32 %v994, %v1345
    %v1347 = vpop.f32.mrb[0].mxu0
    %v1348 = vadd.f32 %v998, %v1347
    %v1349 = vpop.f32.mrb[0].mxu0
    %v1350 = vadd.f32 %v994, %v1349
    %v1351 = vpop.f32.mrb[0].mxu0
    %v1352 = vadd.f32 %v998, %v1351
    %1353 = vdwg.mxu0
    %v1354 = vmax.f32 %v1196, 0.0
    %v1355 = vmax.f32 %v1198, 0.0
    %v1356 = vmax.f32 %v1200, 0.0
    %v1357 = vmax.f32 %v1202, 0.0
    %v1358 = vmax.f32 %v1206, 0.0
    %v1359 = vmax.f32 %v1208, 0.0
    %v1360 = vmax.f32 %v1210, 0.0
    %v1361 = vmax.f32 %v1212, 0.0
    %v1362 = vmax.f32 %v1216, 0.0
    %v1363 = vmax.f32 %v1218, 0.0
    %v1364 = vmax.f32 %v1220, 0.0
    %v1365 = vmax.f32 %v1222, 0.0
    %v1366 = vmax.f32 %v1226, 0.0
    %v1367 = vmax.f32 %v1228, 0.0
    %v1368 = vmax.f32 %v1230, 0.0
    %v1369 = vmax.f32 %v1232, 0.0
    %v1370 = vmax.f32 %v1236, 0.0
    %v1371 = vmax.f32 %v1238, 0.0
    %v1372 = vmax.f32 %v1240, 0.0
    %v1373 = vmax.f32 %v1242, 0.0
    %v1374 = vmax.f32 %v1246, 0.0
    %v1375 = vmax.f32 %v1248, 0.0
    %v1376 = vmax.f32 %v1250, 0.0
    %v1377 = vmax.f32 %v1252, 0.0
    %v1378 = vmax.f32 %v1256, 0.0
    %v1379 = vmax.f32 %v1258, 0.0
    %v1380 = vmax.f32 %v1260, 0.0
    %v1381 = vmax.f32 %v1262, 0.0
    %v1382 = vmax.f32 %v1266, 0.0
    %v1383 = vmax.f32 %v1268, 0.0
    %v1384 = vmax.f32 %v1270, 0.0
    %v1385 = vmax.f32 %v1272, 0.0
    %v1386 = vmax.f32 %v1276, 0.0
    %v1387 = vmax.f32 %v1278, 0.0
    %v1388 = vmax.f32 %v1280, 0.0
    %v1389 = vmax.f32 %v1282, 0.0
    %v1390 = vmax.f32 %v1286, 0.0
    %v1391 = vmax.f32 %v1288, 0.0
    %v1392 = vmax.f32 %v1290, 0.0
    %v1393 = vmax.f32 %v1292, 0.0
    %v1394 = vmax.f32 %v1296, 0.0
    %v1395 = vmax.f32 %v1298, 0.0
    %v1396 = vmax.f32 %v1300, 0.0
    %v1397 = vmax.f32 %v1302, 0.0
    %v1398 = vmax.f32 %v1306, 0.0
    %v1399 = vmax.f32 %v1308, 0.0
    %v1400 = vmax.f32 %v1310, 0.0
    %v1401 = vmax.f32 %v1312, 0.0
    %v1402 = vmax.f32 %v1316, 0.0
    %v1403 = vmax.f32 %v1318, 0.0
    %v1404 = vmax.f32 %v1320, 0.0
    %v1405 = vmax.f32 %v1322, 0.0
    %v1406 = vmax.f32 %v1326, 0.0
    %v1407 = vmax.f32 %v1328, 0.0
    %v1408 = vmax.f32 %v1330, 0.0
    %v1409 = vmax.f32 %v1332, 0.0
    %v1410 = vmax.f32 %v1336, 0.0
    %v1411 = vmax.f32 %v1338, 0.0
    %v1412 = vmax.f32 %v1340, 0.0
    %v1413 = vmax.f32 %v1342, 0.0
    %v1414 = vmax.f32 %v1346, 0.0
    %v1415 = vmax.f32 %v1348, 0.0
    %v1416 = vmax.f32 %v1350, 0.0
    %v1417 = vmax.f32 %v1352, 0.0
    %v1418 = vld [vmem:[%s7] sm:$0x3]
    %v1420 = vlaneseq
    %v1421 = vshrl.u32 %v1420, 7
    %v1422 = vsub.s32 0, %v1421
    %v1423 = vrot.slane %v1418, %v1422
    %v1424 = vlaneseq
    %v1425 = vshrl.u32 %v1424, 7
    %v1426 = vsub.s32 1, %v1425
    %v1427 = vrot.slane %v1418, %v1426
    %v1430 = vmul.f32 %v1354, %v1423
    %v1431 = vmul.f32 %v1355, %v1427
    %v1432 = vmul.f32 %v1356, %v1423
    %v1433 = vmul.f32 %v1357, %v1427
    %v1434 = vmul.f32 %v1358, %v1423
    %v1435 = vmul.f32 %v1359, %v1427
    %v1436 = vmul.f32 %v1360, %v1423
    %v1437 = vmul.f32 %v1361, %v1427
    %v1438 = vmul.f32 %v1362, %v1423
    %v1439 = vmul.f32 %v1363, %v1427
    %v1440 = vmul.f32 %v1364, %v1423
    %v1441 = vmul.f32 %v1365, %v1427
    %v1442 = vmul.f32 %v1366, %v1423
    %v1443 = vmul.f32 %v1367, %v1427
    %v1444 = vmul.f32 %v1368, %v1423
    %v1445 = vmul.f32 %v1369, %v1427
    %v1446 = vmul.f32 %v1370, %v1423
    %v1447 = vmul.f32 %v1371, %v1427
    %v1448 = vmul.f32 %v1372, %v1423
    %v1449 = vmul.f32 %v1373, %v1427
    %v1450 = vmul.f32 %v1374, %v1423
    %v1451 = vmul.f32 %v1375, %v1427
    %v1452 = vmul.f32 %v1376, %v1423
    %v1453 = vmul.f32 %v1377, %v1427
    %v1454 = vmul.f32 %v1378, %v1423
    %v1455 = vmul.f32 %v1379, %v1427
    %v1456 = vmul.f32 %v1380, %v1423
    %v1457 = vmul.f32 %v1381, %v1427
    %v1458 = vmul.f32 %v1382, %v1423
    %v1459 = vmul.f32 %v1383, %v1427
    %v1460 = vmul.f32 %v1384, %v1423
    %v1461 = vmul.f32 %v1385, %v1427
    %v1462 = vmul.f32 %v1386, %v1423
    %v1463 = vmul.f32 %v1387, %v1427
    %v1464 = vmul.f32 %v1388, %v1423
    %v1465 = vmul.f32 %v1389, %v1427
    %v1466 = vmul.f32 %v1390, %v1423
    %v1467 = vmul.f32 %v1391, %v1427
    %v1468 = vmul.f32 %v1392, %v1423
    %v1469 = vmul.f32 %v1393, %v1427
    %v1470 = vmul.f32 %v1394, %v1423
    %v1471 = vmul.f32 %v1395, %v1427
    %v1472 = vmul.f32 %v1396, %v1423
    %v1473 = vmul.f32 %v1397, %v1427
    %v1474 = vmul.f32 %v1398, %v1423
    %v1475 = vmul.f32 %v1399, %v1427
    %v1476 = vmul.f32 %v1400, %v1423
    %v1477 = vmul.f32 %v1401, %v1427
    %v1478 = vmul.f32 %v1402, %v1423
    %v1479 = vmul.f32 %v1403, %v1427
    %v1480 = vmul.f32 %v1404, %v1423
    %v1481 = vmul.f32 %v1405, %v1427
    %v1482 = vmul.f32 %v1406, %v1423
    %v1483 = vmul.f32 %v1407, %v1427
    %v1484 = vmul.f32 %v1408, %v1423
    %v1485 = vmul.f32 %v1409, %v1427
    %v1486 = vmul.f32 %v1410, %v1423
    %v1487 = vmul.f32 %v1411, %v1427
    %v1488 = vmul.f32 %v1412, %v1423
    %v1489 = vmul.f32 %v1413, %v1427
    %v1490 = vmul.f32 %v1414, %v1423
    %v1491 = vmul.f32 %v1415, %v1427
    %v1492 = vmul.f32 %v1416, %v1423
    %v1493 = vmul.f32 %v1417, %v1427
    %v1494 = vadd.f32 %v1430, %v1431
    %1495 = vadd.xlane.f32.xlu0 %v1494
    %v1496 = vpop.xlane.xlu0 %1495
    %v1497 = vadd.f32 %v1432, %v1433
    %1498 = vadd.xlane.f32.xlu0 %v1497
    %v1499 = vpop.xlane.xlu0 %1498
    %v1500 = vadd.f32 %v1434, %v1435
    %1501 = vadd.xlane.f32.xlu0 %v1500
    %v1502 = vpop.xlane.xlu0 %1501
    %v1503 = vadd.f32 %v1436, %v1437
    %1504 = vadd.xlane.f32.xlu0 %v1503
    %v1505 = vpop.xlane.xlu0 %1504
    %v1506 = vadd.f32 %v1438, %v1439
    %1507 = vadd.xlane.f32.xlu0 %v1506
    %v1508 = vpop.xlane.xlu0 %1507
    %v1509 = vadd.f32 %v1440, %v1441
    %1510 = vadd.xlane.f32.xlu0 %v1509
    %v1511 = vpop.xlane.xlu0 %1510
    %v1512 = vadd.f32 %v1442, %v1443
    %1513 = vadd.xlane.f32.xlu0 %v1512
    %v1514 = vpop.xlane.xlu0 %1513
    %v1515 = vadd.f32 %v1444, %v1445
    %1516 = vadd.xlane.f32.xlu0 %v1515
    %v1517 = vpop.xlane.xlu0 %1516
    %v1518 = vadd.f32 %v1446, %v1447
    %1519 = vadd.xlane.f32.xlu0 %v1518
    %v1520 = vpop.xlane.xlu0 %1519
    %v1521 = vadd.f32 %v1448, %v1449
    %1522 = vadd.xlane.f32.xlu0 %v1521
    %v1523 = vpop.xlane.xlu0 %1522
    %v1524 = vadd.f32 %v1450, %v1451
    %1525 = vadd.xlane.f32.xlu0 %v1524
    %v1526 = vpop.xlane.xlu0 %1525
    %v1527 = vadd.f32 %v1452, %v1453
    %1528 = vadd.xlane.f32.xlu0 %v1527
    %v1529 = vpop.xlane.xlu0 %1528
    %v1530 = vadd.f32 %v1454, %v1455
    %1531 = vadd.xlane.f32.xlu0 %v1530
    %v1532 = vpop.xlane.xlu0 %1531
    %v1533 = vadd.f32 %v1456, %v1457
    %1534 = vadd.xlane.f32.xlu0 %v1533
    %v1535 = vpop.xlane.xlu0 %1534
    %v1536 = vadd.f32 %v1458, %v1459
    %1537 = vadd.xlane.f32.xlu0 %v1536
    %v1538 = vpop.xlane.xlu0 %1537
    %v1539 = vadd.f32 %v1460, %v1461
    %1540 = vadd.xlane.f32.xlu0 %v1539
    %v1541 = vpop.xlane.xlu0 %1540
    %v1542 = vadd.f32 %v1462, %v1463
    %1543 = vadd.xlane.f32.xlu0 %v1542
    %v1544 = vpop.xlane.xlu0 %1543
    %v1545 = vadd.f32 %v1464, %v1465
    %1546 = vadd.xlane.f32.xlu0 %v1545
    %v1547 = vpop.xlane.xlu0 %1546
    %v1548 = vadd.f32 %v1466, %v1467
    %1549 = vadd.xlane.f32.xlu0 %v1548
    %v1550 = vpop.xlane.xlu0 %1549
    %v1551 = vadd.f32 %v1468, %v1469
    %1552 = vadd.xlane.f32.xlu0 %v1551
    %v1553 = vpop.xlane.xlu0 %1552
    %v1554 = vadd.f32 %v1470, %v1471
    %1555 = vadd.xlane.f32.xlu0 %v1554
    %v1556 = vpop.xlane.xlu0 %1555
    %v1557 = vadd.f32 %v1472, %v1473
    %1558 = vadd.xlane.f32.xlu0 %v1557
    %v1559 = vpop.xlane.xlu0 %1558
    %v1560 = vadd.f32 %v1474, %v1475
    %1561 = vadd.xlane.f32.xlu0 %v1560
    %v1562 = vpop.xlane.xlu0 %1561
    %v1563 = vadd.f32 %v1476, %v1477
    %1564 = vadd.xlane.f32.xlu0 %v1563
    %v1565 = vpop.xlane.xlu0 %1564
    %v1566 = vadd.f32 %v1478, %v1479
    %1567 = vadd.xlane.f32.xlu0 %v1566
    %v1568 = vpop.xlane.xlu0 %1567
    %v1569 = vadd.f32 %v1480, %v1481
    %1570 = vadd.xlane.f32.xlu0 %v1569
    %v1571 = vpop.xlane.xlu0 %1570
    %v1572 = vadd.f32 %v1482, %v1483
    %1573 = vadd.xlane.f32.xlu0 %v1572
    %v1574 = vpop.xlane.xlu0 %1573
    %v1575 = vadd.f32 %v1484, %v1485
    %1576 = vadd.xlane.f32.xlu0 %v1575
    %v1577 = vpop.xlane.xlu0 %1576
    %v1578 = vadd.f32 %v1486, %v1487
    %1579 = vadd.xlane.f32.xlu0 %v1578
    %v1580 = vpop.xlane.xlu0 %1579
    %v1581 = vadd.f32 %v1488, %v1489
    %1582 = vadd.xlane.f32.xlu0 %v1581
    %v1583 = vpop.xlane.xlu0 %1582
    %v1584 = vadd.f32 %v1490, %v1491
    %1585 = vadd.xlane.f32.xlu0 %v1584
    %v1586 = vpop.xlane.xlu0 %1585
    %v1587 = vadd.f32 %v1492, %v1493
    %1588 = vadd.xlane.f32.xlu0 %v1587
    %v1589 = vpop.xlane.xlu0 %1588
    %v1590 = vld [vmem:[#allocation2] sm:$0x1]
    %v1592 = vlaneseq
    %v1593 = vshrl.u32 %v1592, 7
    %v1594 = vsub.s32 0, %v1593
    %v1595 = vrot.slane %v1590, %v1594
    %v1597 = vadd.f32 %v1496, %v1595
    %v1598 = vadd.f32 %v1499, %v1595
    %v1599 = vadd.f32 %v1502, %v1595
    %v1600 = vadd.f32 %v1505, %v1595
    %v1601 = vadd.f32 %v1508, %v1595
    %v1602 = vadd.f32 %v1511, %v1595
    %v1603 = vadd.f32 %v1514, %v1595
    %v1604 = vadd.f32 %v1517, %v1595
    %v1605 = vadd.f32 %v1520, %v1595
    %v1606 = vadd.f32 %v1523, %v1595
    %v1607 = vadd.f32 %v1526, %v1595
    %v1608 = vadd.f32 %v1529, %v1595
    %v1609 = vadd.f32 %v1532, %v1595
    %v1610 = vadd.f32 %v1535, %v1595
    %v1611 = vadd.f32 %v1538, %v1595
    %v1612 = vadd.f32 %v1541, %v1595
    %v1613 = vadd.f32 %v1544, %v1595
    %v1614 = vadd.f32 %v1547, %v1595
    %v1615 = vadd.f32 %v1550, %v1595
    %v1616 = vadd.f32 %v1553, %v1595
    %v1617 = vadd.f32 %v1556, %v1595
    %v1618 = vadd.f32 %v1559, %v1595
    %v1619 = vadd.f32 %v1562, %v1595
    %v1620 = vadd.f32 %v1565, %v1595
    %v1621 = vadd.f32 %v1568, %v1595
    %v1622 = vadd.f32 %v1571, %v1595
    %v1623 = vadd.f32 %v1574, %v1595
    %v1624 = vadd.f32 %v1577, %v1595
    %v1625 = vadd.f32 %v1580, %v1595
    %v1626 = vadd.f32 %v1583, %v1595
    %v1627 = vadd.f32 %v1586, %v1595
    %v1628 = vadd.f32 %v1589, %v1595
    %vm1629 = vcmask 7168
    %1630 = vst.msk [vmem:[%s9] sm:$0xff] %vm1629, %v1597
    %1631 = vst.msk [vmem:[%s9 + $0x8] sm:$0xff] %vm1629, %v1598
    %1632 = vst.msk [vmem:[%s9 + $0x10] sm:$0xff] %vm1629, %v1599
    %1633 = vst.msk [vmem:[%s9 + $0x18] sm:$0xff] %vm1629, %v1600
    %1634 = vst.msk [vmem:[%s9 + $0x20] sm:$0xff] %vm1629, %v1601
    %1635 = vst.msk [vmem:[%s9 + $0x28] sm:$0xff] %vm1629, %v1602
    %1636 = vst.msk [vmem:[%s9 + $0x30] sm:$0xff] %vm1629, %v1603
    %1637 = vst.msk [vmem:[%s9 + $0x38] sm:$0xff] %vm1629, %v1604
    %1638 = vst.msk [vmem:[%s9 + $0x40] sm:$0xff] %vm1629, %v1605
    %1639 = vst.msk [vmem:[%s9 + $0x48] sm:$0xff] %vm1629, %v1606
    %1640 = vst.msk [vmem:[%s9 + $0x50] sm:$0xff] %vm1629, %v1607
    %1641 = vst.msk [vmem:[%s9 + $0x58] sm:$0xff] %vm1629, %v1608
    %1642 = vst.msk [vmem:[%s9 + $0x60] sm:$0xff] %vm1629, %v1609
    %1643 = vst.msk [vmem:[%s9 + $0x68] sm:$0xff] %vm1629, %v1610
    %1644 = vst.msk [vmem:[%s9 + $0x70] sm:$0xff] %vm1629, %v1611
    %1645 = vst.msk [vmem:[%s9 + $0x78] sm:$0xff] %vm1629, %v1612
    %1646 = vst.msk [vmem:[%s9 + $0x80] sm:$0xff] %vm1629, %v1613
    %1647 = vst.msk [vmem:[%s9 + $0x88] sm:$0xff] %vm1629, %v1614
    %1648 = vst.msk [vmem:[%s9 + $0x90] sm:$0xff] %vm1629, %v1615
    %1649 = vst.msk [vmem:[%s9 + $0x98] sm:$0xff] %vm1629, %v1616
    %1650 = vst.msk [vmem:[%s9 + $0xa0] sm:$0xff] %vm1629, %v1617
    %1651 = vst.msk [vmem:[%s9 + $0xa8] sm:$0xff] %vm1629, %v1618
    %1652 = vst.msk [vmem:[%s9 + $0xb0] sm:$0xff] %vm1629, %v1619
    %1653 = vst.msk [vmem:[%s9 + $0xb8] sm:$0xff] %vm1629, %v1620
    %1654 = vst.msk [vmem:[%s9 + $0xc0] sm:$0xff] %vm1629, %v1621
    %1655 = vst.msk [vmem:[%s9 + $0xc8] sm:$0xff] %vm1629, %v1622
    %1656 = vst.msk [vmem:[%s9 + $0xd0] sm:$0xff] %vm1629, %v1623
    %1657 = vst.msk [vmem:[%s9 + $0xd8] sm:$0xff] %vm1629, %v1624
    %1658 = vst.msk [vmem:[%s9 + $0xe0] sm:$0xff] %vm1629, %v1625
    %1659 = vst.msk [vmem:[%s9 + $0xe8] sm:$0xff] %vm1629, %v1626
    %1660 = vst.msk [vmem:[%s9 + $0xf0] sm:$0xff] %vm1629, %v1627
    %1661 = vst.msk [vmem:[%s9 + $0xf8] sm:$0xff] %vm1629, %v1628
    // Predicated region
    $region42: #{tpu_custom_call.1} parent=1 // pred_check
      _
    $region43: #{tpu_custom_call.1} parent=1 // pred_check_branch
      %1663 = sbr.rel (0) target = $region45
    $region44: #{tpu_custom_call.1} parent=1 // pred_region
      _
    $region45: #{tpu_custom_call.1} parent=1 // pred_fallthru
      _
    // Predicated region
    $region46: #{tpu_custom_call.1} parent=1 // pred_check
      _
    $region47: #{tpu_custom_call.1} parent=1 // pred_check_branch
      %1665 = sbr.rel (0) target = $region49
    $region48: #{tpu_custom_call.1} parent=1 // pred_region
      _
    $region49: #{tpu_custom_call.1} parent=1 // pred_fallthru
      _
    %1666 = vsyncpa [#allocation4], 1

</llo_original>
